<compile_context>
chip_gen: v7x
topology: tpu7x:2x2x1
jax: 0.10.0
libtpu: 0.0.40
codegen_flags: <defaults>
</compile_context>

<pallas_src>
import jax
import jax.numpy as jnp
from jax.experimental import pallas as pl
from jax.experimental.pallas import tpu as pltpu


LANE = 128
TILE_M = 512   # max batch-tile rows (multiple of 8 sublanes)


def _round_up(x, m):
    return ((x + m - 1) // m) * m


# --------------------------------------------------------------------------
# Fused Pallas kernel: (conv-as-matmul) -> ReLU -> fc1 -> ReLU -> fc_q
# --------------------------------------------------------------------------
def _soft_q_kernel(x_ref, wc_ref, bc_ref, w1_ref, b1_ref, wq_ref, bq_ref, o_ref):
    cdt = wc_ref.dtype                                        # bf16 fast path / f32 exact path
    h = jnp.dot(x_ref[...], wc_ref[...], preferred_element_type=jnp.float32)
    h = jnp.maximum(h + bc_ref[...], 0.0)                     # conv bias + ReLU (f32)
    h = jnp.dot(h.astype(cdt), w1_ref[...], preferred_element_type=jnp.float32)
    h = jnp.maximum(h + b1_ref[...], 0.0)                     # fc1 bias + ReLU (f32)
    q = jnp.dot(h.astype(cdt), wq_ref[...], preferred_element_type=jnp.float32)
    o_ref[...] = q + bq_ref[...]                              # fc_q (lane-padded to 128)


# --------------------------------------------------------------------------
# Parameter prep (one-time, static): fold conv + flatten order into a dense matmul
# --------------------------------------------------------------------------
def conv_to_dense(conv_w, H, W):
    """conv_w: (O, C, KH, KW) OIHW -> dense (C*H*W, O*Ho*Wo) so that
       x.reshape(N, C*H*W) @ dense == Flatten(Conv2d_valid(x)) in NCHW order."""
    O, C, KH, KW = conv_w.shape
    Ho, Wo = H - KH + 1, W - KW + 1
    o, c, kh, kw, ph, pw = jnp.meshgrid(
        jnp.arange(O), jnp.arange(C), jnp.arange(KH), jnp.arange(KW),
        jnp.arange(Ho), jnp.arange(Wo), indexing="ij")
    rows = (c * H + (ph + kh)) * W + (pw + kw)          # NCHW-flatten index of input
    cols = (o * Ho + ph) * Wo + pw                      # NCHW-flatten index of output
    vals = jnp.broadcast_to(conv_w[:, :, :, :, None, None], rows.shape)
    dense = jnp.zeros((C * H * W, O * Ho * Wo), jnp.float32)
    return dense.at[rows.ravel(), cols.ravel()].add(vals.astype(jnp.float32).ravel())


def prepare_params(params, H, W, compute_dtype=jnp.bfloat16):
    """Convert PyTorch-layout params to the fused-kernel layout.
       compute_dtype=jnp.bfloat16 -> MXU-native fast path (f32 accumulation);
       compute_dtype=jnp.float32  -> exact f32 semantics."""
    conv_w = params["conv_w"]
    O, C, KH, KW = conv_w.shape
    Ho, Wo = H - KH + 1, W - KW + 1
    D = C * H * W
    Dp = _round_up(max(D, LANE), LANE)                  # pad contraction dim (400 -> 512)
    A = params["fcq_w"].shape[0]
    F1 = params["fc1_w"].shape[0]
    Qp = _round_up(max(A, LANE), LANE)                  # lane-dense Q head

    wc = conv_to_dense(conv_w, H, W)                            # (D, 16*Ho*Wo)
    wc = jnp.zeros((Dp, wc.shape[1]), jnp.float32).at[:D, :].set(wc)
    wq = jnp.zeros((F1, Qp), jnp.float32).at[:, :A].set(params["fcq_w"].T)
    bq = jnp.zeros((1, Qp), jnp.float32).at[:, :A].set(params["fcq_b"][None, :])
    return {
        "D": D, "Dp": Dp,
        "wc": wc.astype(compute_dtype),                               # (Dp, 16*Ho*Wo)
        "bc": jnp.repeat(params["conv_b"], Ho * Wo)[None, :].astype(jnp.float32),
        "w1": params["fc1_w"].T.astype(compute_dtype),                # (16*Ho*Wo, 128)
        "b1": params["fc1_b"][None, :].astype(jnp.float32),           # (1, 128)
        "wq": wq.astype(compute_dtype),                               # (128, Qp)
        "bq": bq,                                                     # (1, Qp) f32
    }


# --------------------------------------------------------------------------
# Forward wrapper
# --------------------------------------------------------------------------
def soft_q_forward(kp, x, n_actions):
    """x: (N, C, H, W) -> q_vals: (N, n_actions) float32."""
    compute_dtype = kp["wc"].dtype
    x = x.astype(jnp.float32)
    N = x.shape[0]
    D, Dp = kp["D"], kp["Dp"]
    Hc = kp["wc"].shape[1]          # 16*Ho*Wo
    F1 = kp["w1"].shape[1]          # 128
    Qp = kp["wq"].shape[1]          # lane-padded action dim

    x_flat = x.reshape(N, D)
    if Dp != D:
        x_flat = jnp.pad(x_flat, ((0, 0), (0, Dp - D)))   # zero cols match zero wc rows
    x_flat = x_flat.astype(compute_dtype)

    # Batch tiling: >=2 grid steps for moderate/large N (lets "parallel" shard across
    # v7x's 2 TCs), tiles capped at TILE_M to amortize per-step overhead on v5e/v6e.
    if N <= 8:
        tm = N                                            # full-array block (legal: equals dims)
    else:
        tm = min(TILE_M, _round_up(pl.cdiv(N, 2), 8))
    n_pad = _round_up(N, tm)
    if n_pad != N:
        x_flat = jnp.pad(x_flat, ((0, n_pad - N), (0, 0)))
    grid = (n_pad // tm,)

    itemsize = jnp.dtype(compute_dtype).itemsize
    flops = 2 * n_pad * (Dp * Hc + Hc * F1 + F1 * Qp)
    bytes_accessed = (
        n_pad * Dp * itemsize                              # streamed x tiles
        + (Dp * Hc + Hc * F1 + F1 * Qp) * itemsize         # resident weights
        + (Hc + F1 + Qp) * 4                               # biases (f32)
        + n_pad * Qp * 4)                                  # output (f32)

    out = pl.pallas_call(
        _soft_q_kernel,
        out_shape=jax.ShapeDtypeStruct((n_pad, Qp), jnp.float32),
        grid=grid,
        in_specs=[
            pl.BlockSpec((tm, Dp), lambda i: (i, 0)),     # obs tile (streams over grid)
            pl.BlockSpec((Dp, Hc), lambda i: (0, 0)),     # dense conv matrix (resident)
            pl.BlockSpec((1, Hc), lambda i: (0, 0)),
            pl.BlockSpec((Hc, F1), lambda i: (0, 0)),
            pl.BlockSpec((1, F1), lambda i: (0, 0)),
            pl.BlockSpec((F1, Qp), lambda i: (0, 0)),
            pl.BlockSpec((1, Qp), lambda i: (0, 0)),
        ],
        out_specs=pl.BlockSpec((tm, Qp), lambda i: (i, 0)),
        compiler_params=pltpu.CompilerParams(
            dimension_semantics=("parallel",),            # shards tiles across v7x's 2 TCs
            vmem_limit_bytes=48 * 1024 * 1024,            # safe under v7x's 64 MiB VMEM
        ),
        cost_estimate=pl.CostEstimate(
            flops=flops, transcendentals=0, bytes_accessed=bytes_accessed),
    )(x_flat, kp["wc"], kp["bc"], kp["w1"], kp["b1"], kp["wq"], kp["bq"])
    return out[:N, :n_actions]


# --------------------------------------------------------------------------
# PyTorch-semantics parameter init + pure-JAX reference
# --------------------------------------------------------------------------
def init_params(key, in_channels, H, W, n_actions):
    Ho, Wo = H - 2, W - 2
    out_dim = 16 * Ho * Wo
    k1, k2, k3 = jax.random.split(key, 3)

    def kaiming(k, shape, fan_in):
        return (jax.random.normal(k, shape, jnp.float32)
                * jnp.sqrt(2.0 / fan_in)).astype(jnp.float32)

    return {
        "conv_w": kaiming(k1, (16, in_channels, 3, 3), in_channels * 9),
        "conv_b": jnp.zeros((16,), jnp.float32),
        "fc1_w": kaiming(k2, (128, out_dim), out_dim),
        "fc1_b": jnp.zeros((128,), jnp.float32),
        "fcq_w": kaiming(k3, (n_actions, 128), 128),
        "fcq_b": jnp.zeros((n_actions,), jnp.float32),
    }


def reference_forward(params, x):
    """Pure-JAX reference with PyTorch semantics (NCHW / OIHW)."""
    y = jax.lax.conv_general_dilated(
        x, params["conv_w"], window_strides=(1, 1), padding="VALID",
        dimension_numbers=("NCHW", "OIHW", "NCHW"))
    y = y + params["conv_b"][None, :, None, None]
    y = jnp.maximum(y.reshape(x.shape[0], -1), 0.0)
    h = jnp.maximum(y @ params["fc1_w"].T + params["fc1_b"], 0.0)
    return h @ params["fcq_w"].T + params["fcq_b"]


if __name__ == "__main__":
    # MinAtar-like observation: 4 channels, 10x10 grid; 6 discrete actions.
    N, C, H, W, A = 2, 4, 10, 10, 6
    key = jax.random.PRNGKey(0)
    k_param, k_obs, k_obs2 = jax.random.split(key, 3)

    params = init_params(k_param, C, H, W, A)
    kp_f32 = prepare_params(params, H, W, compute_dtype=jnp.float32)   # exact path
    kp_bf16 = prepare_params(params, H, W, compute_dtype=jnp.bfloat16)  # fast path

    # Small batch: single full-array block path.
    x = jax.random.normal(k_obs, (N, C, H, W), jnp.float32)
    q_ref = jax.block_until_ready(reference_forward(params, x))

    q_f32 = jax.block_until_ready(soft_q_forward(kp_f32, x, A))
    assert q_f32.shape == (N, A) and q_f32.dtype == jnp.float32
    assert jnp.allclose(q_f32, q_ref, rtol=1e-4, atol=1e-4), "small-batch f32 mismatch"

    q_bf16 = jax.block_until_ready(soft_q_forward(kp_bf16, x, A))
    assert q_bf16.shape == (N, A) and q_bf16.dtype == jnp.float32
    assert jnp.allclose(q_bf16, q_ref, rtol=5e-2, atol=5e-2), "small-batch bf16 mismatch"

    # Larger batch: tiled + padded 'parallel' grid path (2 tiles).
    N2 = 300
    x2 = jax.random.normal(k_obs2, (N2, C, H, W), jnp.float32)
    q2_ref = jax.block_until_ready(reference_forward(params, x2))

    q2_f32 = jax.block_until_ready(soft_q_forward(kp_f32, x2, A))
    assert q2_f32.shape == (N2, A)
    assert jnp.allclose(q2_f32, q2_ref, rtol=1e-4, atol=1e-4), "tiled-batch f32 mismatch"

    q2_bf16 = jax.block_until_ready(soft_q_forward(kp_bf16, x2, A))
    assert q2_bf16.shape == (N2, A)
    assert jnp.allclose(q2_bf16, q2_ref, rtol=5e-2, atol=5e-2), "tiled-batch bf16 mismatch"

    print("KERNEL_OK")
</pallas_src>

<mosaic_0001>
module attributes {stable_mosaic.version = 11 : i64} {
  func.func @_soft_q_kernel(%arg0: i32, %arg1: memref<2x512xf32, #tpu.memory_space<vmem>>, %arg2: memref<512x1024xf32, #tpu.memory_space<vmem>>, %arg3: memref<1x1024xf32, #tpu.memory_space<vmem>>, %arg4: memref<1024x128xf32, #tpu.memory_space<vmem>>, %arg5: memref<1x128xf32, #tpu.memory_space<vmem>>, %arg6: memref<128x128xf32, #tpu.memory_space<vmem>>, %arg7: memref<1x128xf32, #tpu.memory_space<vmem>>, %arg8: memref<2x128xf32, #tpu.memory_space<vmem>>) attributes {dimension_semantics = [#tpu.dimension_semantics<parallel>], iteration_bounds = array<i64: 1>, scalar_prefetch = 0 : i64, scratch_operands = 0 : i64, tpu.core_type = #tpu.core_type<tc>, window_params = [{transform_indices = @transform_0, window_bounds = array<i64: 2, 512>}, {pipeline_mode = #tpu.pipeline_mode<synchronous>, transform_indices = @transform_1, window_bounds = array<i64: 512, 1024>}, {pipeline_mode = #tpu.pipeline_mode<synchronous>, transform_indices = @transform_2, window_bounds = array<i64: 1, 1024>}, {pipeline_mode = #tpu.pipeline_mode<synchronous>, transform_indices = @transform_3, window_bounds = array<i64: 1024, 128>}, {pipeline_mode = #tpu.pipeline_mode<synchronous>, transform_indices = @transform_4, window_bounds = array<i64: 1, 128>}, {pipeline_mode = #tpu.pipeline_mode<synchronous>, transform_indices = @transform_5, window_bounds = array<i64: 128, 128>}, {pipeline_mode = #tpu.pipeline_mode<synchronous>, transform_indices = @transform_6, window_bounds = array<i64: 1, 128>}, {transform_indices = @transform_7, window_bounds = array<i64: 2, 128>}]} {
    %c0 = arith.constant 0 : index
    %c0_0 = arith.constant 0 : index
    %0 = vector.load %arg1[%c0, %c0_0] : memref<2x512xf32, #tpu.memory_space<vmem>>, vector<2x512xf32>
    %c0_1 = arith.constant 0 : index
    %c0_2 = arith.constant 0 : index
    %1 = vector.load %arg2[%c0_1, %c0_2] : memref<512x1024xf32, #tpu.memory_space<vmem>>, vector<512x1024xf32>
    %cst = arith.constant dense<0.000000e+00> : vector<2x1024xf32>
    %2 = tpu.matmul %0, %1, %cst {dimension_numbers = #tpu.dot_dimension_numbers<[1], [0], [0], [1], [0, 0, 1, 1], [], []>} : vector<2x512xf32>, vector<512x1024xf32>, vector<2x1024xf32> -> vector<2x1024xf32>
    %c0_3 = arith.constant 0 : index
    %c0_4 = arith.constant 0 : index
    %3 = vector.load %arg3[%c0_3, %c0_4] : memref<1x1024xf32, #tpu.memory_space<vmem>>, vector<1x1024xf32>
    %4 = vector.broadcast %3 : vector<1x1024xf32> to vector<2x1024xf32>
    %5 = arith.addf %2, %4 : vector<2x1024xf32>
    %cst_5 = arith.constant 0.000000e+00 : f32
    %6 = vector.broadcast %cst_5 : f32 to vector<2x1024xf32>
    %7 = arith.maximumf %5, %6 : vector<2x1024xf32>
    %c0_6 = arith.constant 0 : index
    %c0_7 = arith.constant 0 : index
    %8 = vector.load %arg4[%c0_6, %c0_7] : memref<1024x128xf32, #tpu.memory_space<vmem>>, vector<1024x128xf32>
    %cst_8 = arith.constant dense<0.000000e+00> : vector<2x128xf32>
    %9 = tpu.matmul %7, %8, %cst_8 {dimension_numbers = #tpu.dot_dimension_numbers<[1], [0], [0], [1], [0, 0, 1, 1], [], []>} : vector<2x1024xf32>, vector<1024x128xf32>, vector<2x128xf32> -> vector<2x128xf32>
    %c0_9 = arith.constant 0 : index
    %c0_10 = arith.constant 0 : index
    %10 = vector.load %arg5[%c0_9, %c0_10] : memref<1x128xf32, #tpu.memory_space<vmem>>, vector<1x128xf32>
    %11 = vector.broadcast %10 : vector<1x128xf32> to vector<2x128xf32>
    %12 = arith.addf %9, %11 : vector<2x128xf32>
    %cst_11 = arith.constant 0.000000e+00 : f32
    %13 = vector.broadcast %cst_11 : f32 to vector<2x128xf32>
    %14 = arith.maximumf %12, %13 : vector<2x128xf32>
    %c0_12 = arith.constant 0 : index
    %c0_13 = arith.constant 0 : index
    %15 = vector.load %arg6[%c0_12, %c0_13] : memref<128x128xf32, #tpu.memory_space<vmem>>, vector<128x128xf32>
    %cst_14 = arith.constant dense<0.000000e+00> : vector<2x128xf32>
    %16 = tpu.matmul %14, %15, %cst_14 {dimension_numbers = #tpu.dot_dimension_numbers<[1], [0], [0], [1], [0, 0, 1, 1], [], []>} : vector<2x128xf32>, vector<128x128xf32>, vector<2x128xf32> -> vector<2x128xf32>
    %c0_15 = arith.constant 0 : index
    %c0_16 = arith.constant 0 : index
    %17 = vector.load %arg7[%c0_15, %c0_16] : memref<1x128xf32, #tpu.memory_space<vmem>>, vector<1x128xf32>
    %18 = vector.broadcast %17 : vector<1x128xf32> to vector<2x128xf32>
    %19 = arith.addf %16, %18 : vector<2x128xf32>
    %c0_17 = arith.constant 0 : index
    %c0_18 = arith.constant 0 : index
    %20 = vector.load %arg8[%c0_17, %c0_18] : memref<2x128xf32, #tpu.memory_space<vmem>>, vector<2x128xf32>
    tpu.vector_store %arg8[%c0_17, %c0_18], %19 {strides = array<i32>} : memref<2x128xf32, #tpu.memory_space<vmem>>, vector<2x128xf32>,
    return
  }
  func.func @transform_0(%arg0: i32) -> (i32, i32) {
    %c0_i32 = arith.constant 0 : i32
    %c0_i32_0 = arith.constant 0 : i32
    return %arg0, %c0_i32 : i32, i32
  }
  func.func @transform_1(%arg0: i32) -> (i32, i32) {
    %c0_i32 = arith.constant 0 : i32
    %c0_i32_0 = arith.constant 0 : i32
    %c0_i32_1 = arith.constant 0 : i32
    return %c0_i32, %c0_i32_0 : i32, i32
  }
  func.func @transform_2(%arg0: i32) -> (i32, i32) {
    %c0_i32 = arith.constant 0 : i32
    %c0_i32_0 = arith.constant 0 : i32
    %c0_i32_1 = arith.constant 0 : i32
    return %c0_i32, %c0_i32_0 : i32, i32
  }
  func.func @transform_3(%arg0: i32) -> (i32, i32) {
    %c0_i32 = arith.constant 0 : i32
    %c0_i32_0 = arith.constant 0 : i32
    %c0_i32_1 = arith.constant 0 : i32
    return %c0_i32, %c0_i32_0 : i32, i32
  }
  func.func @transform_4(%arg0: i32) -> (i32, i32) {
    %c0_i32 = arith.constant 0 : i32
    %c0_i32_0 = arith.constant 0 : i32
    %c0_i32_1 = arith.constant 0 : i32
    return %c0_i32, %c0_i32_0 : i32, i32
  }
  func.func @transform_5(%arg0: i32) -> (i32, i32) {
    %c0_i32 = arith.constant 0 : i32
    %c0_i32_0 = arith.constant 0 : i32
    %c0_i32_1 = arith.constant 0 : i32
    return %c0_i32, %c0_i32_0 : i32, i32
  }
  func.func @transform_6(%arg0: i32) -> (i32, i32) {
    %c0_i32 = arith.constant 0 : i32
    %c0_i32_0 = arith.constant 0 : i32
    %c0_i32_1 = arith.constant 0 : i32
    return %c0_i32, %c0_i32_0 : i32, i32
  }
  func.func @transform_7(%arg0: i32) -> (i32, i32) {
    %c0_i32 = arith.constant 0 : i32
    %c0_i32_0 = arith.constant 0 : i32
    return %arg0, %c0_i32 : i32, i32
  }
}

</mosaic_0001>

<llo_original>
// kernel: tpu_custom_call.1
$region0: #{tpu_custom_call.1}
  #allocation0 [shape = 'u32[]', space=smem, size = 0x4, offset = 0x4, fixed_abs, tag = 'smem constant byte address 0x4 - core index']
  #allocation1 [shape = 'u32[144,128]{1,0:T(1,128)}', space=vmem, size = 0x12000, scoped, tag = 'internal scratch']
  %s0 = inlined_call_operand.hbm [shape: f32[2,512], index: 0, kind: input, shape index: {}]
  %s1 = inlined_call_operand.hbm [shape: f32[512,1024], index: 1, kind: input, shape index: {}]
  %s2 = inlined_call_operand.hbm [shape: f32[1,1024], index: 2, kind: input, shape index: {}]
  %s3 = inlined_call_operand.hbm [shape: f32[1024,128], index: 3, kind: input, shape index: {}]
  %s4 = inlined_call_operand.hbm [shape: f32[1,128], index: 4, kind: input, shape index: {}]
  %s5 = inlined_call_operand.hbm [shape: f32[128,128], index: 5, kind: input, shape index: {}]
  %s6 = inlined_call_operand.hbm [shape: f32[1,128], index: 6, kind: input, shape index: {}]
  %s7 = inlined_call_operand.hbm [shape: f32[2,128], index: 7, kind: output, shape index: {}]
  %s8 = sld [smem:[#allocation0]]
  $region66: #{tpu_custom_call.1} parent=0
    _
  %s10 = ssub.s32 1, %s8
  %s11 = scalar_select 0, %s10, %s8
  $region1: #{tpu_custom_call.1} parent=0
    #allocation2 [shape = 'u8[4096]{0}', space=vmem, size = 0x1000, scoped, tag = 'input window, operand 0, single buffered']
    #allocation3 [shape = 's32[1]{0}', space=sflag, size = 0x4, scoped, tag = 'scoped memory for tpu_custom_call.1']
    #allocation4 [shape = 's32[1]{0}', space=sflag, size = 0x4, scoped, tag = 'scoped memory for tpu_custom_call.1']
    #allocation5 [shape = 'u8[2097152]{0}', space=vmem, size = 0x200000, scoped, tag = 'input window, operand 1, single buffered']
    #allocation6 [shape = 's32[1]{0}', space=sflag, size = 0x4, scoped, tag = 'scoped memory for tpu_custom_call.1']
    #allocation7 [shape = 'u8[4096]{0}', space=vmem, size = 0x1000, scoped, tag = 'input window, operand 2, single buffered']
    #allocation8 [shape = 'u8[524288]{0}', space=vmem, size = 0x80000, scoped, tag = 'input window, operand 3, single buffered']
    #allocation9 [shape = 's32[1]{0}', space=sflag, size = 0x4, scoped, tag = 'scoped memory for tpu_custom_call.1']
    #allocation10 [shape = 'u8[512]{0}', space=vmem, size = 0x400, scoped, tag = 'input window, operand 4, single buffered']
    #allocation11 [shape = 'u8[65536]{0}', space=vmem, size = 0x10000, scoped, tag = 'input window, operand 5, single buffered']
    #allocation12 [shape = 's32[1]{0}', space=sflag, size = 0x4, scoped, tag = 'scoped memory for tpu_custom_call.1']
    #allocation13 [shape = 'u8[512]{0}', space=vmem, size = 0x400, scoped, tag = 'input window, operand 6, single buffered']
    #allocation14 [shape = 'u8[1024]{0}', space=vmem, size = 0x400, scoped, tag = 'output window, operand 0, single buffered']
    %12 = vsyncpa [#allocation3], 0
    %13 = vsyncpa [#allocation6], 0
    %14 = vsyncpa [#allocation9], 0
    %15 = vsyncpa [#allocation12], 0
    %16 = vsyncpa [#allocation4], 0
    // Predicated region
    $region2: #{tpu_custom_call.1} parent=1 // pred_check
      _
    $region3: #{tpu_custom_call.1} parent=1 // pred_check_branch
      %18 = sbr.rel (0) target = $region5
    $region4: #{tpu_custom_call.1} parent=1 // pred_region
      %s20 = ssub.s32 128, 128
      %21 = vsyncadd [#allocation3], %s20
      %s23 = sshll.u32 [#allocation2], 4
      %s24 = int_to_ptr.vmem [resolvable:$true] %s23
      %26 = dma.hbm_to_vmem [thread:$0]  %s0, 128, %s24, [#allocation3]
    $region5: #{tpu_custom_call.1} parent=1 // pred_fallthru
      _
    // Predicated region
    $region6: #{tpu_custom_call.1} parent=1 // pred_check
      _
    $region7: #{tpu_custom_call.1} parent=1 // pred_check_branch
      %28 = sbr.rel (0) target = $region9
    $region8: #{tpu_custom_call.1} parent=1 // pred_region
      %s30 = ssub.s32 65536, 65536
      %31 = vsyncadd [#allocation6], %s30
      %s32 = sshll.u32 [#allocation5], 4
      %s33 = int_to_ptr.vmem [resolvable:$true] %s32
      %38 = dma.hbm_to_vmem [thread:$0]  %s1, 65536, %s33, [#allocation6], 1024, 1024, 64
    $region9: #{tpu_custom_call.1} parent=1 // pred_fallthru
      _
    // Predicated region
    $region10: #{tpu_custom_call.1} parent=1 // pred_check
      _
    $region11: #{tpu_custom_call.1} parent=1 // pred_check_branch
      %40 = sbr.rel (0) target = $region13
    $region12: #{tpu_custom_call.1} parent=1 // pred_region
      %s42 = ssub.s32 128, 128
      %43 = vsyncadd [#allocation6], %s42
      %s45 = sshll.u32 [#allocation7], 4
      %s46 = int_to_ptr.vmem [resolvable:$true] %s45
      %48 = dma.hbm_to_vmem [thread:$0]  %s2, 128, %s46, [#allocation6]
    $region13: #{tpu_custom_call.1} parent=1 // pred_fallthru
      _
    // Predicated region
    $region14: #{tpu_custom_call.1} parent=1 // pred_check
      _
    $region15: #{tpu_custom_call.1} parent=1 // pred_check_branch
      %50 = sbr.rel (0) target = $region17
    $region16: #{tpu_custom_call.1} parent=1 // pred_region
      %s52 = ssub.s32 16384, 16384
      %53 = vsyncadd [#allocation9], %s52
      %s54 = sshll.u32 [#allocation8], 4
      %s55 = int_to_ptr.vmem [resolvable:$true] %s54
      %60 = dma.hbm_to_vmem [thread:$0]  %s3, 16384, %s55, [#allocation9], 128, 128, 8
    $region17: #{tpu_custom_call.1} parent=1 // pred_fallthru
      _
    // Predicated region
    $region18: #{tpu_custom_call.1} parent=1 // pred_check
      _
    $region19: #{tpu_custom_call.1} parent=1 // pred_check_branch
      %62 = sbr.rel (0) target = $region21
    $region20: #{tpu_custom_call.1} parent=1 // pred_region
      %s64 = ssub.s32 16, 16
      %65 = vsyncadd [#allocation9], %s64
      %s67 = sshll.u32 [#allocation10], 4
      %s68 = int_to_ptr.vmem [resolvable:$true] %s67
      %70 = dma.hbm_to_vmem [thread:$0]  %s4, 16, %s68, [#allocation9]
    $region21: #{tpu_custom_call.1} parent=1 // pred_fallthru
      _
    // Predicated region
    $region22: #{tpu_custom_call.1} parent=1 // pred_check
      _
    $region23: #{tpu_custom_call.1} parent=1 // pred_check_branch
      %72 = sbr.rel (0) target = $region25
    $region24: #{tpu_custom_call.1} parent=1 // pred_region
      %s74 = ssub.s32 2048, 2048
      %75 = vsyncadd [#allocation12], %s74
      %s76 = sshll.u32 [#allocation11], 4
      %s77 = int_to_ptr.vmem [resolvable:$true] %s76
      %82 = dma.hbm_to_vmem [thread:$0]  %s5, 2048, %s77, [#allocation12], 128, 128, 8
    $region25: #{tpu_custom_call.1} parent=1 // pred_fallthru
      _
    // Predicated region
    $region26: #{tpu_custom_call.1} parent=1 // pred_check
      _
    $region27: #{tpu_custom_call.1} parent=1 // pred_check_branch
      %84 = sbr.rel (0) target = $region29
    $region28: #{tpu_custom_call.1} parent=1 // pred_region
      %s86 = ssub.s32 16, 16
      %87 = vsyncadd [#allocation12], %s86
      %s89 = sshll.u32 [#allocation13], 4
      %s90 = int_to_ptr.vmem [resolvable:$true] %s89
      %92 = dma.hbm_to_vmem [thread:$0]  %s6, 16, %s90, [#allocation12]
    $region29: #{tpu_custom_call.1} parent=1 // pred_fallthru
      _
    // Predicated region
    $region30: #{tpu_custom_call.1} parent=1 // pred_check
      _
    $region31: #{tpu_custom_call.1} parent=1 // pred_check_branch
      %94 = sbr.rel (0) target = $region33
    $region32: #{tpu_custom_call.1} parent=1 // pred_region
      %95 = dma.done [#allocation3], 128
    $region33: #{tpu_custom_call.1} parent=1 // pred_fallthru
      _
    // Predicated region
    $region34: #{tpu_custom_call.1} parent=1 // pred_check
      _
    $region35: #{tpu_custom_call.1} parent=1 // pred_check_branch
      %97 = sbr.rel (0) target = $region37
    $region36: #{tpu_custom_call.1} parent=1 // pred_region
      %98 = dma.done [#allocation6], 65536
    $region37: #{tpu_custom_call.1} parent=1 // pred_fallthru
      _
    // Predicated region
    $region38: #{tpu_custom_call.1} parent=1 // pred_check
      _
    $region39: #{tpu_custom_call.1} parent=1 // pred_check_branch
      %100 = sbr.rel (0) target = $region41
    $region40: #{tpu_custom_call.1} parent=1 // pred_region
      %101 = dma.done [#allocation6], 128
    $region41: #{tpu_custom_call.1} parent=1 // pred_fallthru
      _
    // Predicated region
    $region42: #{tpu_custom_call.1} parent=1 // pred_check
      _
    $region43: #{tpu_custom_call.1} parent=1 // pred_check_branch
      %103 = sbr.rel (0) target = $region45
    $region44: #{tpu_custom_call.1} parent=1 // pred_region
      %104 = dma.done [#allocation9], 16384
    $region45: #{tpu_custom_call.1} parent=1 // pred_fallthru
      _
    // Predicated region
    $region46: #{tpu_custom_call.1} parent=1 // pred_check
      _
    $region47: #{tpu_custom_call.1} parent=1 // pred_check_branch
      %106 = sbr.rel (0) target = $region49
    $region48: #{tpu_custom_call.1} parent=1 // pred_region
      %107 = dma.done [#allocation9], 16
    $region49: #{tpu_custom_call.1} parent=1 // pred_fallthru
      _
    // Predicated region
    $region50: #{tpu_custom_call.1} parent=1 // pred_check
      _
    $region51: #{tpu_custom_call.1} parent=1 // pred_check_branch
      %109 = sbr.rel (0) target = $region53
    $region52: #{tpu_custom_call.1} parent=1 // pred_region
      %110 = dma.done [#allocation12], 2048
    $region53: #{tpu_custom_call.1} parent=1 // pred_fallthru
      _
    // Predicated region
    $region54: #{tpu_custom_call.1} parent=1 // pred_check
      _
    $region55: #{tpu_custom_call.1} parent=1 // pred_check_branch
      %112 = sbr.rel (0) target = $region57
    $region56: #{tpu_custom_call.1} parent=1 // pred_region
      %113 = dma.done [#allocation12], 16
    $region57: #{tpu_custom_call.1} parent=1 // pred_fallthru
      _
    %v114 = vld [vmem:[#allocation2] sm:$0xff]
    %v115 = vld [vmem:[#allocation5] sm:$0xff]
    %v116 = vld [vmem:[#allocation5 + $0x8] sm:$0xff]
    %v117 = vld [vmem:[#allocation5 + $0x10] sm:$0xff]
    %v118 = vld [vmem:[#allocation5 + $0x18] sm:$0xff]
    %v119 = vld [vmem:[#allocation5 + $0x20] sm:$0xff]
    %v120 = vld [vmem:[#allocation5 + $0x28] sm:$0xff]
    %v121 = vld [vmem:[#allocation5 + $0x30] sm:$0xff]
    %v122 = vld [vmem:[#allocation5 + $0x38] sm:$0xff]
    %v123 = vld [vmem:[#allocation5 + $0x40] sm:$0xff]
    %v124 = vld [vmem:[#allocation5 + $0x48] sm:$0xff]
    %v125 = vld [vmem:[#allocation5 + $0x50] sm:$0xff]
    %v126 = vld [vmem:[#allocation5 + $0x58] sm:$0xff]
    %v127 = vld [vmem:[#allocation5 + $0x60] sm:$0xff]
    %v128 = vld [vmem:[#allocation5 + $0x68] sm:$0xff]
    %v129 = vld [vmem:[#allocation5 + $0x70] sm:$0xff]
    %v130 = vld [vmem:[#allocation5 + $0x78] sm:$0xff]
    %v131 = vld [vmem:[#allocation5 + $0x80] sm:$0xff]
    %v132 = vld [vmem:[#allocation5 + $0x88] sm:$0xff]
    %v133 = vld [vmem:[#allocation5 + $0x90] sm:$0xff]
    %v134 = vld [vmem:[#allocation5 + $0x98] sm:$0xff]
    %v135 = vld [vmem:[#allocation5 + $0xa0] sm:$0xff]
    %v136 = vld [vmem:[#allocation5 + $0xa8] sm:$0xff]
    %v137 = vld [vmem:[#allocation5 + $0xb0] sm:$0xff]
    %v138 = vld [vmem:[#allocation5 + $0xb8] sm:$0xff]
    %v139 = vld [vmem:[#allocation5 + $0xc0] sm:$0xff]
    %v140 = vld [vmem:[#allocation5 + $0xc8] sm:$0xff]
    %v141 = vld [vmem:[#allocation5 + $0xd0] sm:$0xff]
    %v142 = vld [vmem:[#allocation5 + $0xd8] sm:$0xff]
    %v143 = vld [vmem:[#allocation5 + $0xe0] sm:$0xff]
    %v144 = vld [vmem:[#allocation5 + $0xe8] sm:$0xff]
    %v145 = vld [vmem:[#allocation5 + $0xf0] sm:$0xff]
    %v146 = vld [vmem:[#allocation5 + $0xf8] sm:$0xff]
    %v147 = vld [vmem:[#allocation5 + $0x100] sm:$0xff]
    %v148 = vld [vmem:[#allocation5 + $0x108] sm:$0xff]
    %v149 = vld [vmem:[#allocation5 + $0x110] sm:$0xff]
    %v150 = vld [vmem:[#allocation5 + $0x118] sm:$0xff]
    %v151 = vld [vmem:[#allocation5 + $0x120] sm:$0xff]
    %v152 = vld [vmem:[#allocation5 + $0x128] sm:$0xff]
    %v153 = vld [vmem:[#allocation5 + $0x130] sm:$0xff]
    %v154 = vld [vmem:[#allocation5 + $0x138] sm:$0xff]
    %v155 = vld [vmem:[#allocation5 + $0x140] sm:$0xff]
    %v156 = vld [vmem:[#allocation5 + $0x148] sm:$0xff]
    %v157 = vld [vmem:[#allocation5 + $0x150] sm:$0xff]
    %v158 = vld [vmem:[#allocation5 + $0x158] sm:$0xff]
    %v159 = vld [vmem:[#allocation5 + $0x160] sm:$0xff]
    %v160 = vld [vmem:[#allocation5 + $0x168] sm:$0xff]
    %v161 = vld [vmem:[#allocation5 + $0x170] sm:$0xff]
    %v162 = vld [vmem:[#allocation5 + $0x178] sm:$0xff]
    %v163 = vld [vmem:[#allocation5 + $0x180] sm:$0xff]
    %v164 = vld [vmem:[#allocation5 + $0x188] sm:$0xff]
    %v165 = vld [vmem:[#allocation5 + $0x190] sm:$0xff]
    %v166 = vld [vmem:[#allocation5 + $0x198] sm:$0xff]
    %v167 = vld [vmem:[#allocation5 + $0x1a0] sm:$0xff]
    %v168 = vld [vmem:[#allocation5 + $0x1a8] sm:$0xff]
    %v169 = vld [vmem:[#allocation5 + $0x1b0] sm:$0xff]
    %v170 = vld [vmem:[#allocation5 + $0x1b8] sm:$0xff]
    %v171 = vld [vmem:[#allocation5 + $0x1c0] sm:$0xff]
    %v172 = vld [vmem:[#allocation5 + $0x1c8] sm:$0xff]
    %v173 = vld [vmem:[#allocation5 + $0x1d0] sm:$0xff]
    %v174 = vld [vmem:[#allocation5 + $0x1d8] sm:$0xff]
    %v175 = vld [vmem:[#allocation5 + $0x1e0] sm:$0xff]
    %v176 = vld [vmem:[#allocation5 + $0x1e8] sm:$0xff]
    %v177 = vld [vmem:[#allocation5 + $0x1f0] sm:$0xff]
    %v178 = vld [vmem:[#allocation5 + $0x1f8] sm:$0xff]
    %v179 = vld [vmem:[#allocation5 + $0x200] sm:$0xff]
    %v180 = vld [vmem:[#allocation5 + $0x208] sm:$0xff]
    %v181 = vld [vmem:[#allocation5 + $0x210] sm:$0xff]
    %v182 = vld [vmem:[#allocation5 + $0x218] sm:$0xff]
    %v183 = vld [vmem:[#allocation5 + $0x220] sm:$0xff]
    %v184 = vld [vmem:[#allocation5 + $0x228] sm:$0xff]
    %v185 = vld [vmem:[#allocation5 + $0x230] sm:$0xff]
    %v186 = vld [vmem:[#allocation5 + $0x238] sm:$0xff]
    %v187 = vld [vmem:[#allocation5 + $0x240] sm:$0xff]
    %v188 = vld [vmem:[#allocation5 + $0x248] sm:$0xff]
    %v189 = vld [vmem:[#allocation5 + $0x250] sm:$0xff]
    %v190 = vld [vmem:[#allocation5 + $0x258] sm:$0xff]
    %v191 = vld [vmem:[#allocation5 + $0x260] sm:$0xff]
    %v192 = vld [vmem:[#allocation5 + $0x268] sm:$0xff]
    %v193 = vld [vmem:[#allocation5 + $0x270] sm:$0xff]
    %v194 = vld [vmem:[#allocation5 + $0x278] sm:$0xff]
    %v195 = vld [vmem:[#allocation5 + $0x280] sm:$0xff]
    %v196 = vld [vmem:[#allocation5 + $0x288] sm:$0xff]
    %v197 = vld [vmem:[#allocation5 + $0x290] sm:$0xff]
    %v198 = vld [vmem:[#allocation5 + $0x298] sm:$0xff]
    %v199 = vld [vmem:[#allocation5 + $0x2a0] sm:$0xff]
    %v200 = vld [vmem:[#allocation5 + $0x2a8] sm:$0xff]
    %v201 = vld [vmem:[#allocation5 + $0x2b0] sm:$0xff]
    %v202 = vld [vmem:[#allocation5 + $0x2b8] sm:$0xff]
    %v203 = vld [vmem:[#allocation5 + $0x2c0] sm:$0xff]
    %v204 = vld [vmem:[#allocation5 + $0x2c8] sm:$0xff]
    %v205 = vld [vmem:[#allocation5 + $0x2d0] sm:$0xff]
    %v206 = vld [vmem:[#allocation5 + $0x2d8] sm:$0xff]
    %v207 = vld [vmem:[#allocation5 + $0x2e0] sm:$0xff]
    %v208 = vld [vmem:[#allocation5 + $0x2e8] sm:$0xff]
    %v209 = vld [vmem:[#allocation5 + $0x2f0] sm:$0xff]
    %v210 = vld [vmem:[#allocation5 + $0x2f8] sm:$0xff]
    %v211 = vld [vmem:[#allocation5 + $0x300] sm:$0xff]
    %v212 = vld [vmem:[#allocation5 + $0x308] sm:$0xff]
    %v213 = vld [vmem:[#allocation5 + $0x310] sm:$0xff]
    %v214 = vld [vmem:[#allocation5 + $0x318] sm:$0xff]
    %v215 = vld [vmem:[#allocation5 + $0x320] sm:$0xff]
    %v216 = vld [vmem:[#allocation5 + $0x328] sm:$0xff]
    %v217 = vld [vmem:[#allocation5 + $0x330] sm:$0xff]
    %v218 = vld [vmem:[#allocation5 + $0x338] sm:$0xff]
    %v219 = vld [vmem:[#allocation5 + $0x340] sm:$0xff]
    %v220 = vld [vmem:[#allocation5 + $0x348] sm:$0xff]
    %v221 = vld [vmem:[#allocation5 + $0x350] sm:$0xff]
    %v222 = vld [vmem:[#allocation5 + $0x358] sm:$0xff]
    %v223 = vld [vmem:[#allocation5 + $0x360] sm:$0xff]
    %v224 = vld [vmem:[#allocation5 + $0x368] sm:$0xff]
    %v225 = vld [vmem:[#allocation5 + $0x370] sm:$0xff]
    %v226 = vld [vmem:[#allocation5 + $0x378] sm:$0xff]
    %v227 = vld [vmem:[#allocation5 + $0x380] sm:$0xff]
    %v228 = vld [vmem:[#allocation5 + $0x388] sm:$0xff]
    %v229 = vld [vmem:[#allocation5 + $0x390] sm:$0xff]
    %v230 = vld [vmem:[#allocation5 + $0x398] sm:$0xff]
    %v231 = vld [vmem:[#allocation5 + $0x3a0] sm:$0xff]
    %v232 = vld [vmem:[#allocation5 + $0x3a8] sm:$0xff]
    %v233 = vld [vmem:[#allocation5 + $0x3b0] sm:$0xff]
    %v234 = vld [vmem:[#allocation5 + $0x3b8] sm:$0xff]
    %v235 = vld [vmem:[#allocation5 + $0x3c0] sm:$0xff]
    %v236 = vld [vmem:[#allocation5 + $0x3c8] sm:$0xff]
    %v237 = vld [vmem:[#allocation5 + $0x3d0] sm:$0xff]
    %v238 = vld [vmem:[#allocation5 + $0x3d8] sm:$0xff]
    %v239 = vld [vmem:[#allocation5 + $0x3e0] sm:$0xff]
    %v240 = vld [vmem:[#allocation5 + $0x3e8] sm:$0xff]
    %v241 = vld [vmem:[#allocation5 + $0x3f0] sm:$0xff]
    %v242 = vld [vmem:[#allocation5 + $0x3f8] sm:$0xff]
    %v243 = vld [vmem:[#allocation5 + $0x400] sm:$0xff]
    %v244 = vld [vmem:[#allocation5 + $0x408] sm:$0xff]
    %v245 = vld [vmem:[#allocation5 + $0x410] sm:$0xff]
    %v246 = vld [vmem:[#allocation5 + $0x418] sm:$0xff]
    %v247 = vld [vmem:[#allocation5 + $0x420] sm:$0xff]
    %v248 = vld [vmem:[#allocation5 + $0x428] sm:$0xff]
    %v249 = vld [vmem:[#allocation5 + $0x430] sm:$0xff]
    %v250 = vld [vmem:[#allocation5 + $0x438] sm:$0xff]
    %v251 = vld [vmem:[#allocation5 + $0x440] sm:$0xff]
    %v252 = vld [vmem:[#allocation5 + $0x448] sm:$0xff]
    %v253 = vld [vmem:[#allocation5 + $0x450] sm:$0xff]
    %v254 = vld [vmem:[#allocation5 + $0x458] sm:$0xff]
    %v255 = vld [vmem:[#allocation5 + $0x460] sm:$0xff]
    %v256 = vld [vmem:[#allocation5 + $0x468] sm:$0xff]
    %v257 = vld [vmem:[#allocation5 + $0x470] sm:$0xff]
    %v258 = vld [vmem:[#allocation5 + $0x478] sm:$0xff]
    %v259 = vld [vmem:[#allocation5 + $0x480] sm:$0xff]
    %v260 = vld [vmem:[#allocation5 + $0x488] sm:$0xff]
    %v261 = vld [vmem:[#allocation5 + $0x490] sm:$0xff]
    %v262 = vld [vmem:[#allocation5 + $0x498] sm:$0xff]
    %v263 = vld [vmem:[#allocation5 + $0x4a0] sm:$0xff]
    %v264 = vld [vmem:[#allocation5 + $0x4a8] sm:$0xff]
    %v265 = vld [vmem:[#allocation5 + $0x4b0] sm:$0xff]
    %v266 = vld [vmem:[#allocation5 + $0x4b8] sm:$0xff]
    %v267 = vld [vmem:[#allocation5 + $0x4c0] sm:$0xff]
    %v268 = vld [vmem:[#allocation5 + $0x4c8] sm:$0xff]
    %v269 = vld [vmem:[#allocation5 + $0x4d0] sm:$0xff]
    %v270 = vld [vmem:[#allocation5 + $0x4d8] sm:$0xff]
    %v271 = vld [vmem:[#allocation5 + $0x4e0] sm:$0xff]
    %v272 = vld [vmem:[#allocation5 + $0x4e8] sm:$0xff]
    %v273 = vld [vmem:[#allocation5 + $0x4f0] sm:$0xff]
    %v274 = vld [vmem:[#allocation5 + $0x4f8] sm:$0xff]
    %v275 = vld [vmem:[#allocation5 + $0x500] sm:$0xff]
    %v276 = vld [vmem:[#allocation5 + $0x508] sm:$0xff]
    %v277 = vld [vmem:[#allocation5 + $0x510] sm:$0xff]
    %v278 = vld [vmem:[#allocation5 + $0x518] sm:$0xff]
    %v279 = vld [vmem:[#allocation5 + $0x520] sm:$0xff]
    %v280 = vld [vmem:[#allocation5 + $0x528] sm:$0xff]
    %v281 = vld [vmem:[#allocation5 + $0x530] sm:$0xff]
    %v282 = vld [vmem:[#allocation5 + $0x538] sm:$0xff]
    %v283 = vld [vmem:[#allocation5 + $0x540] sm:$0xff]
    %v284 = vld [vmem:[#allocation5 + $0x548] sm:$0xff]
    %v285 = vld [vmem:[#allocation5 + $0x550] sm:$0xff]
    %v286 = vld [vmem:[#allocation5 + $0x558] sm:$0xff]
    %v287 = vld [vmem:[#allocation5 + $0x560] sm:$0xff]
    %v288 = vld [vmem:[#allocation5 + $0x568] sm:$0xff]
    %v289 = vld [vmem:[#allocation5 + $0x570] sm:$0xff]
    %v290 = vld [vmem:[#allocation5 + $0x578] sm:$0xff]
    %v291 = vld [vmem:[#allocation5 + $0x580] sm:$0xff]
    %v292 = vld [vmem:[#allocation5 + $0x588] sm:$0xff]
    %v293 = vld [vmem:[#allocation5 + $0x590] sm:$0xff]
    %v294 = vld [vmem:[#allocation5 + $0x598] sm:$0xff]
    %v295 = vld [vmem:[#allocation5 + $0x5a0] sm:$0xff]
    %v296 = vld [vmem:[#allocation5 + $0x5a8] sm:$0xff]
    %v297 = vld [vmem:[#allocation5 + $0x5b0] sm:$0xff]
    %v298 = vld [vmem:[#allocation5 + $0x5b8] sm:$0xff]
    %v299 = vld [vmem:[#allocation5 + $0x5c0] sm:$0xff]
    %v300 = vld [vmem:[#allocation5 + $0x5c8] sm:$0xff]
    %v301 = vld [vmem:[#allocation5 + $0x5d0] sm:$0xff]
    %v302 = vld [vmem:[#allocation5 + $0x5d8] sm:$0xff]
    %v303 = vld [vmem:[#allocation5 + $0x5e0] sm:$0xff]
    %v304 = vld [vmem:[#allocation5 + $0x5e8] sm:$0xff]
    %v305 = vld [vmem:[#allocation5 + $0x5f0] sm:$0xff]
    %v306 = vld [vmem:[#allocation5 + $0x5f8] sm:$0xff]
    %v307 = vld [vmem:[#allocation5 + $0x600] sm:$0xff]
    %v308 = vld [vmem:[#allocation5 + $0x608] sm:$0xff]
    %v309 = vld [vmem:[#allocation5 + $0x610] sm:$0xff]
    %v310 = vld [vmem:[#allocation5 + $0x618] sm:$0xff]
    %v311 = vld [vmem:[#allocation5 + $0x620] sm:$0xff]
    %v312 = vld [vmem:[#allocation5 + $0x628] sm:$0xff]
    %v313 = vld [vmem:[#allocation5 + $0x630] sm:$0xff]
    %v314 = vld [vmem:[#allocation5 + $0x638] sm:$0xff]
    %v315 = vld [vmem:[#allocation5 + $0x640] sm:$0xff]
    %v316 = vld [vmem:[#allocation5 + $0x648] sm:$0xff]
    %v317 = vld [vmem:[#allocation5 + $0x650] sm:$0xff]
    %v318 = vld [vmem:[#allocation5 + $0x658] sm:$0xff]
    %v319 = vld [vmem:[#allocation5 + $0x660] sm:$0xff]
    %v320 = vld [vmem:[#allocation5 + $0x668] sm:$0xff]
    %v321 = vld [vmem:[#allocation5 + $0x670] sm:$0xff]
    %v322 = vld [vmem:[#allocation5 + $0x678] sm:$0xff]
    %v323 = vld [vmem:[#allocation5 + $0x680] sm:$0xff]
    %v324 = vld [vmem:[#allocation5 + $0x688] sm:$0xff]
    %v325 = vld [vmem:[#allocation5 + $0x690] sm:$0xff]
    %v326 = vld [vmem:[#allocation5 + $0x698] sm:$0xff]
    %v327 = vld [vmem:[#allocation5 + $0x6a0] sm:$0xff]
    %v328 = vld [vmem:[#allocation5 + $0x6a8] sm:$0xff]
    %v329 = vld [vmem:[#allocation5 + $0x6b0] sm:$0xff]
    %v330 = vld [vmem:[#allocation5 + $0x6b8] sm:$0xff]
    %v331 = vld [vmem:[#allocation5 + $0x6c0] sm:$0xff]
    %v332 = vld [vmem:[#allocation5 + $0x6c8] sm:$0xff]
    %v333 = vld [vmem:[#allocation5 + $0x6d0] sm:$0xff]
    %v334 = vld [vmem:[#allocation5 + $0x6d8] sm:$0xff]
    %v335 = vld [vmem:[#allocation5 + $0x6e0] sm:$0xff]
    %v336 = vld [vmem:[#allocation5 + $0x6e8] sm:$0xff]
    %v337 = vld [vmem:[#allocation5 + $0x6f0] sm:$0xff]
    %v338 = vld [vmem:[#allocation5 + $0x6f8] sm:$0xff]
    %v339 = vld [vmem:[#allocation5 + $0x700] sm:$0xff]
    %v340 = vld [vmem:[#allocation5 + $0x708] sm:$0xff]
    %v341 = vld [vmem:[#allocation5 + $0x710] sm:$0xff]
    %v342 = vld [vmem:[#allocation5 + $0x718] sm:$0xff]
    %v343 = vld [vmem:[#allocation5 + $0x720] sm:$0xff]
    %v344 = vld [vmem:[#allocation5 + $0x728] sm:$0xff]
    %v345 = vld [vmem:[#allocation5 + $0x730] sm:$0xff]
    %v346 = vld [vmem:[#allocation5 + $0x738] sm:$0xff]
    %v347 = vld [vmem:[#allocation5 + $0x740] sm:$0xff]
    %v348 = vld [vmem:[#allocation5 + $0x748] sm:$0xff]
    %v349 = vld [vmem:[#allocation5 + $0x750] sm:$0xff]
    %v350 = vld [vmem:[#allocation5 + $0x758] sm:$0xff]
    %v351 = vld [vmem:[#allocation5 + $0x760] sm:$0xff]
    %v352 = vld [vmem:[#allocation5 + $0x768] sm:$0xff]
    %v353 = vld [vmem:[#allocation5 + $0x770] sm:$0xff]
    %v354 = vld [vmem:[#allocation5 + $0x778] sm:$0xff]
    %v355 = vld [vmem:[#allocation5 + $0x780] sm:$0xff]
    %v356 = vld [vmem:[#allocation5 + $0x788] sm:$0xff]
    %v357 = vld [vmem:[#allocation5 + $0x790] sm:$0xff]
    %v358 = vld [vmem:[#allocation5 + $0x798] sm:$0xff]
    %v359 = vld [vmem:[#allocation5 + $0x7a0] sm:$0xff]
    %v360 = vld [vmem:[#allocation5 + $0x7a8] sm:$0xff]
    %v361 = vld [vmem:[#allocation5 + $0x7b0] sm:$0xff]
    %v362 = vld [vmem:[#allocation5 + $0x7b8] sm:$0xff]
    %v363 = vld [vmem:[#allocation5 + $0x7c0] sm:$0xff]
    %v364 = vld [vmem:[#allocation5 + $0x7c8] sm:$0xff]
    %v365 = vld [vmem:[#allocation5 + $0x7d0] sm:$0xff]
    %v366 = vld [vmem:[#allocation5 + $0x7d8] sm:$0xff]
    %v367 = vld [vmem:[#allocation5 + $0x7e0] sm:$0xff]
    %v368 = vld [vmem:[#allocation5 + $0x7e8] sm:$0xff]
    %v369 = vld [vmem:[#allocation5 + $0x7f0] sm:$0xff]
    %v370 = vld [vmem:[#allocation5 + $0x7f8] sm:$0xff]
    %v371 = vld [vmem:[#allocation5 + $0x800] sm:$0xff]
    %v372 = vld [vmem:[#allocation5 + $0x808] sm:$0xff]
    %v373 = vld [vmem:[#allocation5 + $0x810] sm:$0xff]
    %v374 = vld [vmem:[#allocation5 + $0x818] sm:$0xff]
    %v375 = vld [vmem:[#allocation5 + $0x820] sm:$0xff]
    %v376 = vld [vmem:[#allocation5 + $0x828] sm:$0xff]
    %v377 = vld [vmem:[#allocation5 + $0x830] sm:$0xff]
    %v378 = vld [vmem:[#allocation5 + $0x838] sm:$0xff]
    %v379 = vld [vmem:[#allocation5 + $0x840] sm:$0xff]
    %v380 = vld [vmem:[#allocation5 + $0x848] sm:$0xff]
    %v381 = vld [vmem:[#allocation5 + $0x850] sm:$0xff]
    %v382 = vld [vmem:[#allocation5 + $0x858] sm:$0xff]
    %v383 = vld [vmem:[#allocation5 + $0x860] sm:$0xff]
    %v384 = vld [vmem:[#allocation5 + $0x868] sm:$0xff]
    %v385 = vld [vmem:[#allocation5 + $0x870] sm:$0xff]
    %v386 = vld [vmem:[#allocation5 + $0x878] sm:$0xff]
    %v387 = vld [vmem:[#allocation5 + $0x880] sm:$0xff]
    %v388 = vld [vmem:[#allocation5 + $0x888] sm:$0xff]
    %v389 = vld [vmem:[#allocation5 + $0x890] sm:$0xff]
    %v390 = vld [vmem:[#allocation5 + $0x898] sm:$0xff]
    %v391 = vld [vmem:[#allocation5 + $0x8a0] sm:$0xff]
    %v392 = vld [vmem:[#allocation5 + $0x8a8] sm:$0xff]
    %v393 = vld [vmem:[#allocation5 + $0x8b0] sm:$0xff]
    %v394 = vld [vmem:[#allocation5 + $0x8b8] sm:$0xff]
    %v395 = vld [vmem:[#allocation5 + $0x8c0] sm:$0xff]
    %v396 = vld [vmem:[#allocation5 + $0x8c8] sm:$0xff]
    %v397 = vld [vmem:[#allocation5 + $0x8d0] sm:$0xff]
    %v398 = vld [vmem:[#allocation5 + $0x8d8] sm:$0xff]
    %v399 = vld [vmem:[#allocation5 + $0x8e0] sm:$0xff]
    %v400 = vld [vmem:[#allocation5 + $0x8e8] sm:$0xff]
    %v401 = vld [vmem:[#allocation5 + $0x8f0] sm:$0xff]
    %v402 = vld [vmem:[#allocation5 + $0x8f8] sm:$0xff]
    %v403 = vld [vmem:[#allocation5 + $0x900] sm:$0xff]
    %v404 = vld [vmem:[#allocation5 + $0x908] sm:$0xff]
    %v405 = vld [vmem:[#allocation5 + $0x910] sm:$0xff]
    %v406 = vld [vmem:[#allocation5 + $0x918] sm:$0xff]
    %v407 = vld [vmem:[#allocation5 + $0x920] sm:$0xff]
    %v408 = vld [vmem:[#allocation5 + $0x928] sm:$0xff]
    %v409 = vld [vmem:[#allocation5 + $0x930] sm:$0xff]
    %v410 = vld [vmem:[#allocation5 + $0x938] sm:$0xff]
    %v411 = vld [vmem:[#allocation5 + $0x940] sm:$0xff]
    %v412 = vld [vmem:[#allocation5 + $0x948] sm:$0xff]
    %v413 = vld [vmem:[#allocation5 + $0x950] sm:$0xff]
    %v414 = vld [vmem:[#allocation5 + $0x958] sm:$0xff]
    %v415 = vld [vmem:[#allocation5 + $0x960] sm:$0xff]
    %v416 = vld [vmem:[#allocation5 + $0x968] sm:$0xff]
    %v417 = vld [vmem:[#allocation5 + $0x970] sm:$0xff]
    %v418 = vld [vmem:[#allocation5 + $0x978] sm:$0xff]
    %v419 = vld [vmem:[#allocation5 + $0x980] sm:$0xff]
    %v420 = vld [vmem:[#allocation5 + $0x988] sm:$0xff]
    %v421 = vld [vmem:[#allocation5 + $0x990] sm:$0xff]
    %v422 = vld [vmem:[#allocation5 + $0x998] sm:$0xff]
    %v423 = vld [vmem:[#allocation5 + $0x9a0] sm:$0xff]
    %v424 = vld [vmem:[#allocation5 + $0x9a8] sm:$0xff]
    %v425 = vld [vmem:[#allocation5 + $0x9b0] sm:$0xff]
    %v426 = vld [vmem:[#allocation5 + $0x9b8] sm:$0xff]
    %v427 = vld [vmem:[#allocation5 + $0x9c0] sm:$0xff]
    %v428 = vld [vmem:[#allocation5 + $0x9c8] sm:$0xff]
    %v429 = vld [vmem:[#allocation5 + $0x9d0] sm:$0xff]
    %v430 = vld [vmem:[#allocation5 + $0x9d8] sm:$0xff]
    %v431 = vld [vmem:[#allocation5 + $0x9e0] sm:$0xff]
    %v432 = vld [vmem:[#allocation5 + $0x9e8] sm:$0xff]
    %v433 = vld [vmem:[#allocation5 + $0x9f0] sm:$0xff]
    %v434 = vld [vmem:[#allocation5 + $0x9f8] sm:$0xff]
    %v435 = vld [vmem:[#allocation5 + $0xa00] sm:$0xff]
    %v436 = vld [vmem:[#allocation5 + $0xa08] sm:$0xff]
    %v437 = vld [vmem:[#allocation5 + $0xa10] sm:$0xff]
    %v438 = vld [vmem:[#allocation5 + $0xa18] sm:$0xff]
    %v439 = vld [vmem:[#allocation5 + $0xa20] sm:$0xff]
    %v440 = vld [vmem:[#allocation5 + $0xa28] sm:$0xff]
    %v441 = vld [vmem:[#allocation5 + $0xa30] sm:$0xff]
    %v442 = vld [vmem:[#allocation5 + $0xa38] sm:$0xff]
    %v443 = vld [vmem:[#allocation5 + $0xa40] sm:$0xff]
    %v444 = vld [vmem:[#allocation5 + $0xa48] sm:$0xff]
    %v445 = vld [vmem:[#allocation5 + $0xa50] sm:$0xff]
    %v446 = vld [vmem:[#allocation5 + $0xa58] sm:$0xff]
    %v447 = vld [vmem:[#allocation5 + $0xa60] sm:$0xff]
    %v448 = vld [vmem:[#allocation5 + $0xa68] sm:$0xff]
    %v449 = vld [vmem:[#allocation5 + $0xa70] sm:$0xff]
    %v450 = vld [vmem:[#allocation5 + $0xa78] sm:$0xff]
    %v451 = vld [vmem:[#allocation5 + $0xa80] sm:$0xff]
    %v452 = vld [vmem:[#allocation5 + $0xa88] sm:$0xff]
    %v453 = vld [vmem:[#allocation5 + $0xa90] sm:$0xff]
    %v454 = vld [vmem:[#allocation5 + $0xa98] sm:$0xff]
    %v455 = vld [vmem:[#allocation5 + $0xaa0] sm:$0xff]
    %v456 = vld [vmem:[#allocation5 + $0xaa8] sm:$0xff]
    %v457 = vld [vmem:[#allocation5 + $0xab0] sm:$0xff]
    %v458 = vld [vmem:[#allocation5 + $0xab8] sm:$0xff]
    %v459 = vld [vmem:[#allocation5 + $0xac0] sm:$0xff]
    %v460 = vld [vmem:[#allocation5 + $0xac8] sm:$0xff]
    %v461 = vld [vmem:[#allocation5 + $0xad0] sm:$0xff]
    %v462 = vld [vmem:[#allocation5 + $0xad8] sm:$0xff]
    %v463 = vld [vmem:[#allocation5 + $0xae0] sm:$0xff]
    %v464 = vld [vmem:[#allocation5 + $0xae8] sm:$0xff]
    %v465 = vld [vmem:[#allocation5 + $0xaf0] sm:$0xff]
    %v466 = vld [vmem:[#allocation5 + $0xaf8] sm:$0xff]
    %v467 = vld [vmem:[#allocation5 + $0xb00] sm:$0xff]
    %v468 = vld [vmem:[#allocation5 + $0xb08] sm:$0xff]
    %v469 = vld [vmem:[#allocation5 + $0xb10] sm:$0xff]
    %v470 = vld [vmem:[#allocation5 + $0xb18] sm:$0xff]
    %v471 = vld [vmem:[#allocation5 + $0xb20] sm:$0xff]
    %v472 = vld [vmem:[#allocation5 + $0xb28] sm:$0xff]
    %v473 = vld [vmem:[#allocation5 + $0xb30] sm:$0xff]
    %v474 = vld [vmem:[#allocation5 + $0xb38] sm:$0xff]
    %v475 = vld [vmem:[#allocation5 + $0xb40] sm:$0xff]
    %v476 = vld [vmem:[#allocation5 + $0xb48] sm:$0xff]
    %v477 = vld [vmem:[#allocation5 + $0xb50] sm:$0xff]
    %v478 = vld [vmem:[#allocation5 + $0xb58] sm:$0xff]
    %v479 = vld [vmem:[#allocation5 + $0xb60] sm:$0xff]
    %v480 = vld [vmem:[#allocation5 + $0xb68] sm:$0xff]
    %v481 = vld [vmem:[#allocation5 + $0xb70] sm:$0xff]
    %v482 = vld [vmem:[#allocation5 + $0xb78] sm:$0xff]
    %v483 = vld [vmem:[#allocation5 + $0xb80] sm:$0xff]
    %v484 = vld [vmem:[#allocation5 + $0xb88] sm:$0xff]
    %v485 = vld [vmem:[#allocation5 + $0xb90] sm:$0xff]
    %v486 = vld [vmem:[#allocation5 + $0xb98] sm:$0xff]
    %v487 = vld [vmem:[#allocation5 + $0xba0] sm:$0xff]
    %v488 = vld [vmem:[#allocation5 + $0xba8] sm:$0xff]
    %v489 = vld [vmem:[#allocation5 + $0xbb0] sm:$0xff]
    %v490 = vld [vmem:[#allocation5 + $0xbb8] sm:$0xff]
    %v491 = vld [vmem:[#allocation5 + $0xbc0] sm:$0xff]
    %v492 = vld [vmem:[#allocation5 + $0xbc8] sm:$0xff]
    %v493 = vld [vmem:[#allocation5 + $0xbd0] sm:$0xff]
    %v494 = vld [vmem:[#allocation5 + $0xbd8] sm:$0xff]
    %v495 = vld [vmem:[#allocation5 + $0xbe0] sm:$0xff]
    %v496 = vld [vmem:[#allocation5 + $0xbe8] sm:$0xff]
    %v497 = vld [vmem:[#allocation5 + $0xbf0] sm:$0xff]
    %v498 = vld [vmem:[#allocation5 + $0xbf8] sm:$0xff]
    %v499 = vld [vmem:[#allocation5 + $0xc00] sm:$0xff]
    %v500 = vld [vmem:[#allocation5 + $0xc08] sm:$0xff]
    %v501 = vld [vmem:[#allocation5 + $0xc10] sm:$0xff]
    %v502 = vld [vmem:[#allocation5 + $0xc18] sm:$0xff]
    %v503 = vld [vmem:[#allocation5 + $0xc20] sm:$0xff]
    %v504 = vld [vmem:[#allocation5 + $0xc28] sm:$0xff]
    %v505 = vld [vmem:[#allocation5 + $0xc30] sm:$0xff]
    %v506 = vld [vmem:[#allocation5 + $0xc38] sm:$0xff]
    %v507 = vld [vmem:[#allocation5 + $0xc40] sm:$0xff]
    %v508 = vld [vmem:[#allocation5 + $0xc48] sm:$0xff]
    %v509 = vld [vmem:[#allocation5 + $0xc50] sm:$0xff]
    %v510 = vld [vmem:[#allocation5 + $0xc58] sm:$0xff]
    %v511 = vld [vmem:[#allocation5 + $0xc60] sm:$0xff]
    %v512 = vld [vmem:[#allocation5 + $0xc68] sm:$0xff]
    %v513 = vld [vmem:[#allocation5 + $0xc70] sm:$0xff]
    %v514 = vld [vmem:[#allocation5 + $0xc78] sm:$0xff]
    %v515 = vld [vmem:[#allocation5 + $0xc80] sm:$0xff]
    %v516 = vld [vmem:[#allocation5 + $0xc88] sm:$0xff]
    %v517 = vld [vmem:[#allocation5 + $0xc90] sm:$0xff]
    %v518 = vld [vmem:[#allocation5 + $0xc98] sm:$0xff]
    %v519 = vld [vmem:[#allocation5 + $0xca0] sm:$0xff]
    %v520 = vld [vmem:[#allocation5 + $0xca8] sm:$0xff]
    %v521 = vld [vmem:[#allocation5 + $0xcb0] sm:$0xff]
    %v522 = vld [vmem:[#allocation5 + $0xcb8] sm:$0xff]
    %v523 = vld [vmem:[#allocation5 + $0xcc0] sm:$0xff]
    %v524 = vld [vmem:[#allocation5 + $0xcc8] sm:$0xff]
    %v525 = vld [vmem:[#allocation5 + $0xcd0] sm:$0xff]
    %v526 = vld [vmem:[#allocation5 + $0xcd8] sm:$0xff]
    %v527 = vld [vmem:[#allocation5 + $0xce0] sm:$0xff]
    %v528 = vld [vmem:[#allocation5 + $0xce8] sm:$0xff]
    %v529 = vld [vmem:[#allocation5 + $0xcf0] sm:$0xff]
    %v530 = vld [vmem:[#allocation5 + $0xcf8] sm:$0xff]
    %v531 = vld [vmem:[#allocation5 + $0xd00] sm:$0xff]
    %v532 = vld [vmem:[#allocation5 + $0xd08] sm:$0xff]
    %v533 = vld [vmem:[#allocation5 + $0xd10] sm:$0xff]
    %v534 = vld [vmem:[#allocation5 + $0xd18] sm:$0xff]
    %v535 = vld [vmem:[#allocation5 + $0xd20] sm:$0xff]
    %v536 = vld [vmem:[#allocation5 + $0xd28] sm:$0xff]
    %v537 = vld [vmem:[#allocation5 + $0xd30] sm:$0xff]
    %v538 = vld [vmem:[#allocation5 + $0xd38] sm:$0xff]
    %v539 = vld [vmem:[#allocation5 + $0xd40] sm:$0xff]
    %v540 = vld [vmem:[#allocation5 + $0xd48] sm:$0xff]
    %v541 = vld [vmem:[#allocation5 + $0xd50] sm:$0xff]
    %v542 = vld [vmem:[#allocation5 + $0xd58] sm:$0xff]
    %v543 = vld [vmem:[#allocation5 + $0xd60] sm:$0xff]
    %v544 = vld [vmem:[#allocation5 + $0xd68] sm:$0xff]
    %v545 = vld [vmem:[#allocation5 + $0xd70] sm:$0xff]
    %v546 = vld [vmem:[#allocation5 + $0xd78] sm:$0xff]
    %v547 = vld [vmem:[#allocation5 + $0xd80] sm:$0xff]
    %v548 = vld [vmem:[#allocation5 + $0xd88] sm:$0xff]
    %v549 = vld [vmem:[#allocation5 + $0xd90] sm:$0xff]
    %v550 = vld [vmem:[#allocation5 + $0xd98] sm:$0xff]
    %v551 = vld [vmem:[#allocation5 + $0xda0] sm:$0xff]
    %v552 = vld [vmem:[#allocation5 + $0xda8] sm:$0xff]
    %v553 = vld [vmem:[#allocation5 + $0xdb0] sm:$0xff]
    %v554 = vld [vmem:[#allocation5 + $0xdb8] sm:$0xff]
    %v555 = vld [vmem:[#allocation5 + $0xdc0] sm:$0xff]
    %v556 = vld [vmem:[#allocation5 + $0xdc8] sm:$0xff]
    %v557 = vld [vmem:[#allocation5 + $0xdd0] sm:$0xff]
    %v558 = vld [vmem:[#allocation5 + $0xdd8] sm:$0xff]
    %v559 = vld [vmem:[#allocation5 + $0xde0] sm:$0xff]
    %v560 = vld [vmem:[#allocation5 + $0xde8] sm:$0xff]
    %v561 = vld [vmem:[#allocation5 + $0xdf0] sm:$0xff]
    %v562 = vld [vmem:[#allocation5 + $0xdf8] sm:$0xff]
    %v563 = vld [vmem:[#allocation5 + $0xe00] sm:$0xff]
    %v564 = vld [vmem:[#allocation5 + $0xe08] sm:$0xff]
    %v565 = vld [vmem:[#allocation5 + $0xe10] sm:$0xff]
    %v566 = vld [vmem:[#allocation5 + $0xe18] sm:$0xff]
    %v567 = vld [vmem:[#allocation5 + $0xe20] sm:$0xff]
    %v568 = vld [vmem:[#allocation5 + $0xe28] sm:$0xff]
    %v569 = vld [vmem:[#allocation5 + $0xe30] sm:$0xff]
    %v570 = vld [vmem:[#allocation5 + $0xe38] sm:$0xff]
    %v571 = vld [vmem:[#allocation5 + $0xe40] sm:$0xff]
    %v572 = vld [vmem:[#allocation5 + $0xe48] sm:$0xff]
    %v573 = vld [vmem:[#allocation5 + $0xe50] sm:$0xff]
    %v574 = vld [vmem:[#allocation5 + $0xe58] sm:$0xff]
    %v575 = vld [vmem:[#allocation5 + $0xe60] sm:$0xff]
    %v576 = vld [vmem:[#allocation5 + $0xe68] sm:$0xff]
    %v577 = vld [vmem:[#allocation5 + $0xe70] sm:$0xff]
    %v578 = vld [vmem:[#allocation5 + $0xe78] sm:$0xff]
    %v579 = vld [vmem:[#allocation5 + $0xe80] sm:$0xff]
    %v580 = vld [vmem:[#allocation5 + $0xe88] sm:$0xff]
    %v581 = vld [vmem:[#allocation5 + $0xe90] sm:$0xff]
    %v582 = vld [vmem:[#allocation5 + $0xe98] sm:$0xff]
    %v583 = vld [vmem:[#allocation5 + $0xea0] sm:$0xff]
    %v584 = vld [vmem:[#allocation5 + $0xea8] sm:$0xff]
    %v585 = vld [vmem:[#allocation5 + $0xeb0] sm:$0xff]
    %v586 = vld [vmem:[#allocation5 + $0xeb8] sm:$0xff]
    %v587 = vld [vmem:[#allocation5 + $0xec0] sm:$0xff]
    %v588 = vld [vmem:[#allocation5 + $0xec8] sm:$0xff]
    %v589 = vld [vmem:[#allocation5 + $0xed0] sm:$0xff]
    %v590 = vld [vmem:[#allocation5 + $0xed8] sm:$0xff]
    %v591 = vld [vmem:[#allocation5 + $0xee0] sm:$0xff]
    %v592 = vld [vmem:[#allocation5 + $0xee8] sm:$0xff]
    %v593 = vld [vmem:[#allocation5 + $0xef0] sm:$0xff]
    %v594 = vld [vmem:[#allocation5 + $0xef8] sm:$0xff]
    %v595 = vld [vmem:[#allocation5 + $0xf00] sm:$0xff]
    %v596 = vld [vmem:[#allocation5 + $0xf08] sm:$0xff]
    %v597 = vld [vmem:[#allocation5 + $0xf10] sm:$0xff]
    %v598 = vld [vmem:[#allocation5 + $0xf18] sm:$0xff]
    %v599 = vld [vmem:[#allocation5 + $0xf20] sm:$0xff]
    %v600 = vld [vmem:[#allocation5 + $0xf28] sm:$0xff]
    %v601 = vld [vmem:[#allocation5 + $0xf30] sm:$0xff]
    %v602 = vld [vmem:[#allocation5 + $0xf38] sm:$0xff]
    %v603 = vld [vmem:[#allocation5 + $0xf40] sm:$0xff]
    %v604 = vld [vmem:[#allocation5 + $0xf48] sm:$0xff]
    %v605 = vld [vmem:[#allocation5 + $0xf50] sm:$0xff]
    %v606 = vld [vmem:[#allocation5 + $0xf58] sm:$0xff]
    %v607 = vld [vmem:[#allocation5 + $0xf60] sm:$0xff]
    %v608 = vld [vmem:[#allocation5 + $0xf68] sm:$0xff]
    %v609 = vld [vmem:[#allocation5 + $0xf70] sm:$0xff]
    %v610 = vld [vmem:[#allocation5 + $0xf78] sm:$0xff]
    %v611 = vld [vmem:[#allocation5 + $0xf80] sm:$0xff]
    %v612 = vld [vmem:[#allocation5 + $0xf88] sm:$0xff]
    %v613 = vld [vmem:[#allocation5 + $0xf90] sm:$0xff]
    %v614 = vld [vmem:[#allocation5 + $0xf98] sm:$0xff]
    %v615 = vld [vmem:[#allocation5 + $0xfa0] sm:$0xff]
    %v616 = vld [vmem:[#allocation5 + $0xfa8] sm:$0xff]
    %v617 = vld [vmem:[#allocation5 + $0xfb0] sm:$0xff]
    %v618 = vld [vmem:[#allocation5 + $0xfb8] sm:$0xff]
    %v619 = vld [vmem:[#allocation5 + $0xfc0] sm:$0xff]
    %v620 = vld [vmem:[#allocation5 + $0xfc8] sm:$0xff]
    %v621 = vld [vmem:[#allocation5 + $0xfd0] sm:$0xff]
    %v622 = vld [vmem:[#allocation5 + $0xfd8] sm:$0xff]
    %v623 = vld [vmem:[#allocation5 + $0xfe0] sm:$0xff]
    %v624 = vld [vmem:[#allocation5 + $0xfe8] sm:$0xff]
    %v625 = vld [vmem:[#allocation5 + $0xff0] sm:$0xff]
    %v626 = vld [vmem:[#allocation5 + $0xff8] sm:$0xff]
    %v627 = vld [vmem:[#allocation7] sm:$0xff]
    %v629 = vlaneseq
    %v630 = vshrl.u32 %v629, 7
    %v631 = vsub.s32 0, %v630
    %v632 = vrot.slane %v627, %v631
    %v633 = vlaneseq
    %v634 = vshrl.u32 %v633, 7
    %v635 = vsub.s32 1, %v634
    %v636 = vrot.slane %v627, %v635
    %v637 = vlaneseq
    %v638 = vshrl.u32 %v637, 7
    %v639 = vsub.s32 2, %v638
    %v640 = vrot.slane %v627, %v639
    %v641 = vlaneseq
    %v642 = vshrl.u32 %v641, 7
    %v643 = vsub.s32 3, %v642
    %v644 = vrot.slane %v627, %v643
    %v645 = vlaneseq
    %v646 = vshrl.u32 %v645, 7
    %v647 = vsub.s32 4, %v646
    %v648 = vrot.slane %v627, %v647
    %v649 = vlaneseq
    %v650 = vshrl.u32 %v649, 7
    %v651 = vsub.s32 5, %v650
    %v652 = vrot.slane %v627, %v651
    %v653 = vlaneseq
    %v654 = vshrl.u32 %v653, 7
    %v655 = vsub.s32 6, %v654
    %v656 = vrot.slane %v627, %v655
    %v657 = vlaneseq
    %v658 = vshrl.u32 %v657, 7
    %v659 = vsub.s32 7, %v658
    %v660 = vrot.slane %v627, %v659
    %v670 = vcombine.high %v114, %v114
    %v672 = vunpack.c.l.s4 1983009808
    %v673 = vunpack.c.0.s8 %v672
    %v674 = vlaneseq
    %v675 = vshrl.u32 %v674, 7
    %v676 = vsub.s32 %v673, %v675
    %v677 = vrot.slane %v114, %v676
    %v679 = vunpack.c.l.s4 1983009808
    %v680 = vunpack.c.0.s8 %v679
    %v681 = vlaneseq
    %v682 = vshrl.u32 %v681, 7
    %v683 = vsub.s32 %v680, %v682
    %v684 = vrot.slane %v670, %v683
    %v685 = vcombine.high %v677, %v677
    %v686 = vcombine.high %v684, %v684
    %691 = vmatprep.subr.mxu0 %v116
    %692 = vmatpush1.msra.mxu0 %v115
    %693 = vmatprep.subr.mxu0 %v124
    %694 = vmatpush1.msra.mxu0 %v123
    %695 = vmatprep.subr.mxu0 %v132
    %696 = vmatpush1.msra.mxu0 %v131
    %697 = vmatprep.subr.mxu0 %v140
    %698 = vmatpush1.msra.mxu0 %v139
    %699 = vmatprep.subr.mxu0 %v148
    %700 = vmatpush1.msra.mxu0 %v147
    %701 = vmatprep.subr.mxu0 %v156
    %702 = vmatpush1.msra.mxu0 %v155
    %703 = vmatprep.subr.mxu0 %v164
    %704 = vmatpush1.msra.mxu0 %v163
    %705 = vmatprep.subr.mxu0 %v172
    %706 = vmatpush1.msra.mxu0 %v171
    %707 = vmatprep.subr.mxu0 %v180
    %708 = vmatpush1.msra.mxu0 %v179
    %709 = vmatprep.subr.mxu0 %v188
    %710 = vmatpush1.msra.mxu0 %v187
    %711 = vmatprep.subr.mxu0 %v196
    %712 = vmatpush1.msra.mxu0 %v195
    %713 = vmatprep.subr.mxu0 %v204
    %714 = vmatpush1.msra.mxu0 %v203
    %715 = vmatprep.subr.mxu0 %v212
    %716 = vmatpush1.msra.mxu0 %v211
    %717 = vmatprep.subr.mxu0 %v220
    %718 = vmatpush1.msra.mxu0 %v219
    %719 = vmatprep.subr.mxu0 %v228
    %720 = vmatpush1.msra.mxu0 %v227
    %721 = vmatprep.subr.mxu0 %v236
    %722 = vmatpush1.msra.mxu0 %v235
    %723 = vmatprep.subr.mxu0 %v244
    %724 = vmatpush1.msra.mxu0 %v243
    %725 = vmatprep.subr.mxu0 %v252
    %726 = vmatpush1.msra.mxu0 %v251
    %727 = vmatprep.subr.mxu0 %v260
    %728 = vmatpush1.msra.mxu0 %v259
    %729 = vmatprep.subr.mxu0 %v268
    %730 = vmatpush1.msra.mxu0 %v267
    %731 = vmatprep.subr.mxu0 %v276
    %732 = vmatpush1.msra.mxu0 %v275
    %733 = vmatprep.subr.mxu0 %v284
    %734 = vmatpush1.msra.mxu0 %v283
    %735 = vmatprep.subr.mxu0 %v292
    %736 = vmatpush1.msra.mxu0 %v291
    %737 = vmatprep.subr.mxu0 %v300
    %738 = vmatpush1.msra.mxu0 %v299
    %739 = vmatprep.subr.mxu0 %v308
    %740 = vmatpush1.msra.mxu0 %v307
    %741 = vmatprep.subr.mxu0 %v316
    %742 = vmatpush1.msra.mxu0 %v315
    %743 = vmatprep.subr.mxu0 %v324
    %744 = vmatpush1.msra.mxu0 %v323
    %745 = vmatprep.subr.mxu0 %v332
    %746 = vmatpush1.msra.mxu0 %v331
    %747 = vmatprep.subr.mxu0 %v340
    %748 = vmatpush1.msra.mxu0 %v339
    %749 = vmatprep.subr.mxu0 %v348
    %750 = vmatpush1.msra.mxu0 %v347
    %751 = vmatprep.subr.mxu0 %v356
    %752 = vmatpush1.msra.mxu0 %v355
    %753 = vmatprep.subr.mxu0 %v364
    %754 = vmatpush1.msra.mxu0 %v363
    %755 = vmatprep.mubr.f32.mxu0 %v685
    %756 = vmatmul.mubr.f32.gmra.mrb[0].mxu0 %v677
    %v757 = vpop.f32.mrb[0].mxu0
    %v758 = vadd.f32 %v632, %v757
    %v759 = vpop.f32.mrb[0].mxu0
    %v760 = vadd.f32 %v636, %v759
    %761 = vdwg.mxu0
    %762 = vmatprep.subr.mxu0 %v372
    %763 = vmatpush1.msra.mxu0 %v371
    %764 = vmatprep.subr.mxu0 %v380
    %765 = vmatpush1.msra.mxu0 %v379
    %766 = vmatprep.subr.mxu0 %v388
    %767 = vmatpush1.msra.mxu0 %v387
    %768 = vmatprep.subr.mxu0 %v396
    %769 = vmatpush1.msra.mxu0 %v395
    %770 = vmatprep.subr.mxu0 %v404
    %771 = vmatpush1.msra.mxu0 %v403
    %772 = vmatprep.subr.mxu0 %v412
    %773 = vmatpush1.msra.mxu0 %v411
    %774 = vmatprep.subr.mxu0 %v420
    %775 = vmatpush1.msra.mxu0 %v419
    %776 = vmatprep.subr.mxu0 %v428
    %777 = vmatpush1.msra.mxu0 %v427
    %778 = vmatprep.subr.mxu0 %v436
    %779 = vmatpush1.msra.mxu0 %v435
    %780 = vmatprep.subr.mxu0 %v444
    %781 = vmatpush1.msra.mxu0 %v443
    %782 = vmatprep.subr.mxu0 %v452
    %783 = vmatpush1.msra.mxu0 %v451
    %784 = vmatprep.subr.mxu0 %v460
    %785 = vmatpush1.msra.mxu0 %v459
    %786 = vmatprep.subr.mxu0 %v468
    %787 = vmatpush1.msra.mxu0 %v467
    %788 = vmatprep.subr.mxu0 %v476
    %789 = vmatpush1.msra.mxu0 %v475
    %790 = vmatprep.subr.mxu0 %v484
    %791 = vmatpush1.msra.mxu0 %v483
    %792 = vmatprep.subr.mxu0 %v492
    %793 = vmatpush1.msra.mxu0 %v491
    %794 = vmatprep.subr.mxu0 %v500
    %795 = vmatpush1.msra.mxu0 %v499
    %796 = vmatprep.subr.mxu0 %v508
    %797 = vmatpush1.msra.mxu0 %v507
    %798 = vmatprep.subr.mxu0 %v516
    %799 = vmatpush1.msra.mxu0 %v515
    %800 = vmatprep.subr.mxu0 %v524
    %801 = vmatpush1.msra.mxu0 %v523
    %802 = vmatprep.subr.mxu0 %v532
    %803 = vmatpush1.msra.mxu0 %v531
    %804 = vmatprep.subr.mxu0 %v540
    %805 = vmatpush1.msra.mxu0 %v539
    %806 = vmatprep.subr.mxu0 %v548
    %807 = vmatpush1.msra.mxu0 %v547
    %808 = vmatprep.subr.mxu0 %v556
    %809 = vmatpush1.msra.mxu0 %v555
    %810 = vmatprep.subr.mxu0 %v564
    %811 = vmatpush1.msra.mxu0 %v563
    %812 = vmatprep.subr.mxu0 %v572
    %813 = vmatpush1.msra.mxu0 %v571
    %814 = vmatprep.subr.mxu0 %v580
    %815 = vmatpush1.msra.mxu0 %v579
    %816 = vmatprep.subr.mxu0 %v588
    %817 = vmatpush1.msra.mxu0 %v587
    %818 = vmatprep.subr.mxu0 %v596
    %819 = vmatpush1.msra.mxu0 %v595
    %820 = vmatprep.subr.mxu0 %v604
    %821 = vmatpush1.msra.mxu0 %v603
    %822 = vmatprep.subr.mxu0 %v612
    %823 = vmatpush1.msra.mxu0 %v611
    %824 = vmatprep.subr.mxu0 %v620
    %825 = vmatpush1.msra.mxu0 %v619
    %826 = vmatprep.mubr.f32.mxu0 %v686
    %827 = vmatmul.mubr.f32.gmra.mrb[0].mxu0 %v684
    %v828 = vpop.f32.mrb[0].mxu0
    %v829 = vadd.f32 %v758, %v828
    %v830 = vpop.f32.mrb[0].mxu0
    %v831 = vadd.f32 %v760, %v830
    %832 = vdwg.mxu0
    %833 = vmatprep.subr.mxu0 %v118
    %834 = vmatpush1.msra.mxu0 %v117
    %835 = vmatprep.subr.mxu0 %v126
    %836 = vmatpush1.msra.mxu0 %v125
    %837 = vmatprep.subr.mxu0 %v134
    %838 = vmatpush1.msra.mxu0 %v133
    %839 = vmatprep.subr.mxu0 %v142
    %840 = vmatpush1.msra.mxu0 %v141
    %841 = vmatprep.subr.mxu0 %v150
    %842 = vmatpush1.msra.mxu0 %v149
    %843 = vmatprep.subr.mxu0 %v158
    %844 = vmatpush1.msra.mxu0 %v157
    %845 = vmatprep.subr.mxu0 %v166
    %846 = vmatpush1.msra.mxu0 %v165
    %847 = vmatprep.subr.mxu0 %v174
    %848 = vmatpush1.msra.mxu0 %v173
    %849 = vmatprep.subr.mxu0 %v182
    %850 = vmatpush1.msra.mxu0 %v181
    %851 = vmatprep.subr.mxu0 %v190
    %852 = vmatpush1.msra.mxu0 %v189
    %853 = vmatprep.subr.mxu0 %v198
    %854 = vmatpush1.msra.mxu0 %v197
    %855 = vmatprep.subr.mxu0 %v206
    %856 = vmatpush1.msra.mxu0 %v205
    %857 = vmatprep.subr.mxu0 %v214
    %858 = vmatpush1.msra.mxu0 %v213
    %859 = vmatprep.subr.mxu0 %v222
    %860 = vmatpush1.msra.mxu0 %v221
    %861 = vmatprep.subr.mxu0 %v230
    %862 = vmatpush1.msra.mxu0 %v229
    %863 = vmatprep.subr.mxu0 %v238
    %864 = vmatpush1.msra.mxu0 %v237
    %865 = vmatprep.subr.mxu0 %v246
    %866 = vmatpush1.msra.mxu0 %v245
    %867 = vmatprep.subr.mxu0 %v254
    %868 = vmatpush1.msra.mxu0 %v253
    %869 = vmatprep.subr.mxu0 %v262
    %870 = vmatpush1.msra.mxu0 %v261
    %871 = vmatprep.subr.mxu0 %v270
    %872 = vmatpush1.msra.mxu0 %v269
    %873 = vmatprep.subr.mxu0 %v278
    %874 = vmatpush1.msra.mxu0 %v277
    %875 = vmatprep.subr.mxu0 %v286
    %876 = vmatpush1.msra.mxu0 %v285
    %877 = vmatprep.subr.mxu0 %v294
    %878 = vmatpush1.msra.mxu0 %v293
    %879 = vmatprep.subr.mxu0 %v302
    %880 = vmatpush1.msra.mxu0 %v301
    %881 = vmatprep.subr.mxu0 %v310
    %882 = vmatpush1.msra.mxu0 %v309
    %883 = vmatprep.subr.mxu0 %v318
    %884 = vmatpush1.msra.mxu0 %v317
    %885 = vmatprep.subr.mxu0 %v326
    %886 = vmatpush1.msra.mxu0 %v325
    %887 = vmatprep.subr.mxu0 %v334
    %888 = vmatpush1.msra.mxu0 %v333
    %889 = vmatprep.subr.mxu0 %v342
    %890 = vmatpush1.msra.mxu0 %v341
    %891 = vmatprep.subr.mxu0 %v350
    %892 = vmatpush1.msra.mxu0 %v349
    %893 = vmatprep.subr.mxu0 %v358
    %894 = vmatpush1.msra.mxu0 %v357
    %895 = vmatprep.subr.mxu0 %v366
    %896 = vmatpush1.msra.mxu0 %v365
    %897 = vmatprep.mubr.f32.mxu0 %v685
    %898 = vmatmul.mubr.f32.gmra.mrb[0].mxu0 %v677
    %v899 = vpop.f32.mrb[0].mxu0
    %v900 = vadd.f32 %v640, %v899
    %v901 = vpop.f32.mrb[0].mxu0
    %v902 = vadd.f32 %v644, %v901
    %903 = vdwg.mxu0
    %904 = vmatprep.subr.mxu0 %v374
    %905 = vmatpush1.msra.mxu0 %v373
    %906 = vmatprep.subr.mxu0 %v382
    %907 = vmatpush1.msra.mxu0 %v381
    %908 = vmatprep.subr.mxu0 %v390
    %909 = vmatpush1.msra.mxu0 %v389
    %910 = vmatprep.subr.mxu0 %v398
    %911 = vmatpush1.msra.mxu0 %v397
    %912 = vmatprep.subr.mxu0 %v406
    %913 = vmatpush1.msra.mxu0 %v405
    %914 = vmatprep.subr.mxu0 %v414
    %915 = vmatpush1.msra.mxu0 %v413
    %916 = vmatprep.subr.mxu0 %v422
    %917 = vmatpush1.msra.mxu0 %v421
    %918 = vmatprep.subr.mxu0 %v430
    %919 = vmatpush1.msra.mxu0 %v429
    %920 = vmatprep.subr.mxu0 %v438
    %921 = vmatpush1.msra.mxu0 %v437
    %922 = vmatprep.subr.mxu0 %v446
    %923 = vmatpush1.msra.mxu0 %v445
    %924 = vmatprep.subr.mxu0 %v454
    %925 = vmatpush1.msra.mxu0 %v453
    %926 = vmatprep.subr.mxu0 %v462
    %927 = vmatpush1.msra.mxu0 %v461
    %928 = vmatprep.subr.mxu0 %v470
    %929 = vmatpush1.msra.mxu0 %v469
    %930 = vmatprep.subr.mxu0 %v478
    %931 = vmatpush1.msra.mxu0 %v477
    %932 = vmatprep.subr.mxu0 %v486
    %933 = vmatpush1.msra.mxu0 %v485
    %934 = vmatprep.subr.mxu0 %v494
    %935 = vmatpush1.msra.mxu0 %v493
    %936 = vmatprep.subr.mxu0 %v502
    %937 = vmatpush1.msra.mxu0 %v501
    %938 = vmatprep.subr.mxu0 %v510
    %939 = vmatpush1.msra.mxu0 %v509
    %940 = vmatprep.subr.mxu0 %v518
    %941 = vmatpush1.msra.mxu0 %v517
    %942 = vmatprep.subr.mxu0 %v526
    %943 = vmatpush1.msra.mxu0 %v525
    %944 = vmatprep.subr.mxu0 %v534
    %945 = vmatpush1.msra.mxu0 %v533
    %946 = vmatprep.subr.mxu0 %v542
    %947 = vmatpush1.msra.mxu0 %v541
    %948 = vmatprep.subr.mxu0 %v550
    %949 = vmatpush1.msra.mxu0 %v549
    %950 = vmatprep.subr.mxu0 %v558
    %951 = vmatpush1.msra.mxu0 %v557
    %952 = vmatprep.subr.mxu0 %v566
    %953 = vmatpush1.msra.mxu0 %v565
    %954 = vmatprep.subr.mxu0 %v574
    %955 = vmatpush1.msra.mxu0 %v573
    %956 = vmatprep.subr.mxu0 %v582
    %957 = vmatpush1.msra.mxu0 %v581
    %958 = vmatprep.subr.mxu0 %v590
    %959 = vmatpush1.msra.mxu0 %v589
    %960 = vmatprep.subr.mxu0 %v598
    %961 = vmatpush1.msra.mxu0 %v597
    %962 = vmatprep.subr.mxu0 %v606
    %963 = vmatpush1.msra.mxu0 %v605
    %964 = vmatprep.subr.mxu0 %v614
    %965 = vmatpush1.msra.mxu0 %v613
    %966 = vmatprep.subr.mxu0 %v622
    %967 = vmatpush1.msra.mxu0 %v621
    %968 = vmatprep.mubr.f32.mxu0 %v686
    %969 = vmatmul.mubr.f32.gmra.mrb[0].mxu0 %v684
    %v970 = vpop.f32.mrb[0].mxu0
    %v971 = vadd.f32 %v900, %v970
    %v972 = vpop.f32.mrb[0].mxu0
    %v973 = vadd.f32 %v902, %v972
    %974 = vdwg.mxu0
    %975 = vmatprep.subr.mxu0 %v120
    %976 = vmatpush1.msra.mxu0 %v119
    %977 = vmatprep.subr.mxu0 %v128
    %978 = vmatpush1.msra.mxu0 %v127
    %979 = vmatprep.subr.mxu0 %v136
    %980 = vmatpush1.msra.mxu0 %v135
    %981 = vmatprep.subr.mxu0 %v144
    %982 = vmatpush1.msra.mxu0 %v143
    %983 = vmatprep.subr.mxu0 %v152
    %984 = vmatpush1.msra.mxu0 %v151
    %985 = vmatprep.subr.mxu0 %v160
    %986 = vmatpush1.msra.mxu0 %v159
    %987 = vmatprep.subr.mxu0 %v168
    %988 = vmatpush1.msra.mxu0 %v167
    %989 = vmatprep.subr.mxu0 %v176
    %990 = vmatpush1.msra.mxu0 %v175
    %991 = vmatprep.subr.mxu0 %v184
    %992 = vmatpush1.msra.mxu0 %v183
    %993 = vmatprep.subr.mxu0 %v192
    %994 = vmatpush1.msra.mxu0 %v191
    %995 = vmatprep.subr.mxu0 %v200
    %996 = vmatpush1.msra.mxu0 %v199
    %997 = vmatprep.subr.mxu0 %v208
    %998 = vmatpush1.msra.mxu0 %v207
    %999 = vmatprep.subr.mxu0 %v216
    %1000 = vmatpush1.msra.mxu0 %v215
    %1001 = vmatprep.subr.mxu0 %v224
    %1002 = vmatpush1.msra.mxu0 %v223
    %1003 = vmatprep.subr.mxu0 %v232
    %1004 = vmatpush1.msra.mxu0 %v231
    %1005 = vmatprep.subr.mxu0 %v240
    %1006 = vmatpush1.msra.mxu0 %v239
    %1007 = vmatprep.subr.mxu0 %v248
    %1008 = vmatpush1.msra.mxu0 %v247
    %1009 = vmatprep.subr.mxu0 %v256
    %1010 = vmatpush1.msra.mxu0 %v255
    %1011 = vmatprep.subr.mxu0 %v264
    %1012 = vmatpush1.msra.mxu0 %v263
    %1013 = vmatprep.subr.mxu0 %v272
    %1014 = vmatpush1.msra.mxu0 %v271
    %1015 = vmatprep.subr.mxu0 %v280
    %1016 = vmatpush1.msra.mxu0 %v279
    %1017 = vmatprep.subr.mxu0 %v288
    %1018 = vmatpush1.msra.mxu0 %v287
    %1019 = vmatprep.subr.mxu0 %v296
    %1020 = vmatpush1.msra.mxu0 %v295
    %1021 = vmatprep.subr.mxu0 %v304
    %1022 = vmatpush1.msra.mxu0 %v303
    %1023 = vmatprep.subr.mxu0 %v312
    %1024 = vmatpush1.msra.mxu0 %v311
    %1025 = vmatprep.subr.mxu0 %v320
    %1026 = vmatpush1.msra.mxu0 %v319
    %1027 = vmatprep.subr.mxu0 %v328
    %1028 = vmatpush1.msra.mxu0 %v327
    %1029 = vmatprep.subr.mxu0 %v336
    %1030 = vmatpush1.msra.mxu0 %v335
    %1031 = vmatprep.subr.mxu0 %v344
    %1032 = vmatpush1.msra.mxu0 %v343
    %1033 = vmatprep.subr.mxu0 %v352
    %1034 = vmatpush1.msra.mxu0 %v351
    %1035 = vmatprep.subr.mxu0 %v360
    %1036 = vmatpush1.msra.mxu0 %v359
    %1037 = vmatprep.subr.mxu0 %v368
    %1038 = vmatpush1.msra.mxu0 %v367
    %1039 = vmatprep.mubr.f32.mxu0 %v685
    %1040 = vmatmul.mubr.f32.gmra.mrb[0].mxu0 %v677
    %v1041 = vpop.f32.mrb[0].mxu0
    %v1042 = vadd.f32 %v648, %v1041
    %v1043 = vpop.f32.mrb[0].mxu0
    %v1044 = vadd.f32 %v652, %v1043
    %1045 = vdwg.mxu0
    %1046 = vmatprep.subr.mxu0 %v376
    %1047 = vmatpush1.msra.mxu0 %v375
    %1048 = vmatprep.subr.mxu0 %v384
    %1049 = vmatpush1.msra.mxu0 %v383
    %1050 = vmatprep.subr.mxu0 %v392
    %1051 = vmatpush1.msra.mxu0 %v391
    %1052 = vmatprep.subr.mxu0 %v400
    %1053 = vmatpush1.msra.mxu0 %v399
    %1054 = vmatprep.subr.mxu0 %v408
    %1055 = vmatpush1.msra.mxu0 %v407
    %1056 = vmatprep.subr.mxu0 %v416
    %1057 = vmatpush1.msra.mxu0 %v415
    %1058 = vmatprep.subr.mxu0 %v424
    %1059 = vmatpush1.msra.mxu0 %v423
    %1060 = vmatprep.subr.mxu0 %v432
    %1061 = vmatpush1.msra.mxu0 %v431
    %1062 = vmatprep.subr.mxu0 %v440
    %1063 = vmatpush1.msra.mxu0 %v439
    %1064 = vmatprep.subr.mxu0 %v448
    %1065 = vmatpush1.msra.mxu0 %v447
    %1066 = vmatprep.subr.mxu0 %v456
    %1067 = vmatpush1.msra.mxu0 %v455
    %1068 = vmatprep.subr.mxu0 %v464
    %1069 = vmatpush1.msra.mxu0 %v463
    %1070 = vmatprep.subr.mxu0 %v472
    %1071 = vmatpush1.msra.mxu0 %v471
    %1072 = vmatprep.subr.mxu0 %v480
    %1073 = vmatpush1.msra.mxu0 %v479
    %1074 = vmatprep.subr.mxu0 %v488
    %1075 = vmatpush1.msra.mxu0 %v487
    %1076 = vmatprep.subr.mxu0 %v496
    %1077 = vmatpush1.msra.mxu0 %v495
    %1078 = vmatprep.subr.mxu0 %v504
    %1079 = vmatpush1.msra.mxu0 %v503
    %1080 = vmatprep.subr.mxu0 %v512
    %1081 = vmatpush1.msra.mxu0 %v511
    %1082 = vmatprep.subr.mxu0 %v520
    %1083 = vmatpush1.msra.mxu0 %v519
    %1084 = vmatprep.subr.mxu0 %v528
    %1085 = vmatpush1.msra.mxu0 %v527
    %1086 = vmatprep.subr.mxu0 %v536
    %1087 = vmatpush1.msra.mxu0 %v535
    %1088 = vmatprep.subr.mxu0 %v544
    %1089 = vmatpush1.msra.mxu0 %v543
    %1090 = vmatprep.subr.mxu0 %v552
    %1091 = vmatpush1.msra.mxu0 %v551
    %1092 = vmatprep.subr.mxu0 %v560
    %1093 = vmatpush1.msra.mxu0 %v559
    %1094 = vmatprep.subr.mxu0 %v568
    %1095 = vmatpush1.msra.mxu0 %v567
    %1096 = vmatprep.subr.mxu0 %v576
    %1097 = vmatpush1.msra.mxu0 %v575
    %1098 = vmatprep.subr.mxu0 %v584
    %1099 = vmatpush1.msra.mxu0 %v583
    %1100 = vmatprep.subr.mxu0 %v592
    %1101 = vmatpush1.msra.mxu0 %v591
    %1102 = vmatprep.subr.mxu0 %v600
    %1103 = vmatpush1.msra.mxu0 %v599
    %1104 = vmatprep.subr.mxu0 %v608
    %1105 = vmatpush1.msra.mxu0 %v607
    %1106 = vmatprep.subr.mxu0 %v616
    %1107 = vmatpush1.msra.mxu0 %v615
    %1108 = vmatprep.subr.mxu0 %v624
    %1109 = vmatpush1.msra.mxu0 %v623
    %1110 = vmatprep.mubr.f32.mxu0 %v686
    %1111 = vmatmul.mubr.f32.gmra.mrb[0].mxu0 %v684
    %v1112 = vpop.f32.mrb[0].mxu0
    %v1113 = vadd.f32 %v1042, %v1112
    %v1114 = vpop.f32.mrb[0].mxu0
    %v1115 = vadd.f32 %v1044, %v1114
    %1116 = vdwg.mxu0
    %1117 = vmatprep.subr.mxu0 %v122
    %1118 = vmatpush1.msra.mxu0 %v121
    %1119 = vmatprep.subr.mxu0 %v130
    %1120 = vmatpush1.msra.mxu0 %v129
    %1121 = vmatprep.subr.mxu0 %v138
    %1122 = vmatpush1.msra.mxu0 %v137
    %1123 = vmatprep.subr.mxu0 %v146
    %1124 = vmatpush1.msra.mxu0 %v145
    %1125 = vmatprep.subr.mxu0 %v154
    %1126 = vmatpush1.msra.mxu0 %v153
    %1127 = vmatprep.subr.mxu0 %v162
    %1128 = vmatpush1.msra.mxu0 %v161
    %1129 = vmatprep.subr.mxu0 %v170
    %1130 = vmatpush1.msra.mxu0 %v169
    %1131 = vmatprep.subr.mxu0 %v178
    %1132 = vmatpush1.msra.mxu0 %v177
    %1133 = vmatprep.subr.mxu0 %v186
    %1134 = vmatpush1.msra.mxu0 %v185
    %1135 = vmatprep.subr.mxu0 %v194
    %1136 = vmatpush1.msra.mxu0 %v193
    %1137 = vmatprep.subr.mxu0 %v202
    %1138 = vmatpush1.msra.mxu0 %v201
    %1139 = vmatprep.subr.mxu0 %v210
    %1140 = vmatpush1.msra.mxu0 %v209
    %1141 = vmatprep.subr.mxu0 %v218
    %1142 = vmatpush1.msra.mxu0 %v217
    %1143 = vmatprep.subr.mxu0 %v226
    %1144 = vmatpush1.msra.mxu0 %v225
    %1145 = vmatprep.subr.mxu0 %v234
    %1146 = vmatpush1.msra.mxu0 %v233
    %1147 = vmatprep.subr.mxu0 %v242
    %1148 = vmatpush1.msra.mxu0 %v241
    %1149 = vmatprep.subr.mxu0 %v250
    %1150 = vmatpush1.msra.mxu0 %v249
    %1151 = vmatprep.subr.mxu0 %v258
    %1152 = vmatpush1.msra.mxu0 %v257
    %1153 = vmatprep.subr.mxu0 %v266
    %1154 = vmatpush1.msra.mxu0 %v265
    %1155 = vmatprep.subr.mxu0 %v274
    %1156 = vmatpush1.msra.mxu0 %v273
    %1157 = vmatprep.subr.mxu0 %v282
    %1158 = vmatpush1.msra.mxu0 %v281
    %1159 = vmatprep.subr.mxu0 %v290
    %1160 = vmatpush1.msra.mxu0 %v289
    %1161 = vmatprep.subr.mxu0 %v298
    %1162 = vmatpush1.msra.mxu0 %v297
    %1163 = vmatprep.subr.mxu0 %v306
    %1164 = vmatpush1.msra.mxu0 %v305
    %1165 = vmatprep.subr.mxu0 %v314
    %1166 = vmatpush1.msra.mxu0 %v313
    %1167 = vmatprep.subr.mxu0 %v322
    %1168 = vmatpush1.msra.mxu0 %v321
    %1169 = vmatprep.subr.mxu0 %v330
    %1170 = vmatpush1.msra.mxu0 %v329
    %1171 = vmatprep.subr.mxu0 %v338
    %1172 = vmatpush1.msra.mxu0 %v337
    %1173 = vmatprep.subr.mxu0 %v346
    %1174 = vmatpush1.msra.mxu0 %v345
    %1175 = vmatprep.subr.mxu0 %v354
    %1176 = vmatpush1.msra.mxu0 %v353
    %1177 = vmatprep.subr.mxu0 %v362
    %1178 = vmatpush1.msra.mxu0 %v361
    %1179 = vmatprep.subr.mxu0 %v370
    %1180 = vmatpush1.msra.mxu0 %v369
    %1181 = vmatprep.mubr.f32.mxu0 %v685
    %1182 = vmatmul.mubr.f32.gmra.mrb[0].mxu0 %v677
    %v1183 = vpop.f32.mrb[0].mxu0
    %v1184 = vadd.f32 %v656, %v1183
    %v1185 = vpop.f32.mrb[0].mxu0
    %v1186 = vadd.f32 %v660, %v1185
    %1187 = vdwg.mxu0
    %1188 = vmatprep.subr.mxu0 %v378
    %1189 = vmatpush1.msra.mxu0 %v377
    %1190 = vmatprep.subr.mxu0 %v386
    %1191 = vmatpush1.msra.mxu0 %v385
    %1192 = vmatprep.subr.mxu0 %v394
    %1193 = vmatpush1.msra.mxu0 %v393
    %1194 = vmatprep.subr.mxu0 %v402
    %1195 = vmatpush1.msra.mxu0 %v401
    %1196 = vmatprep.subr.mxu0 %v410
    %1197 = vmatpush1.msra.mxu0 %v409
    %1198 = vmatprep.subr.mxu0 %v418
    %1199 = vmatpush1.msra.mxu0 %v417
    %1200 = vmatprep.subr.mxu0 %v426
    %1201 = vmatpush1.msra.mxu0 %v425
    %1202 = vmatprep.subr.mxu0 %v434
    %1203 = vmatpush1.msra.mxu0 %v433
    %1204 = vmatprep.subr.mxu0 %v442
    %1205 = vmatpush1.msra.mxu0 %v441
    %1206 = vmatprep.subr.mxu0 %v450
    %1207 = vmatpush1.msra.mxu0 %v449
    %1208 = vmatprep.subr.mxu0 %v458
    %1209 = vmatpush1.msra.mxu0 %v457
    %1210 = vmatprep.subr.mxu0 %v466
    %1211 = vmatpush1.msra.mxu0 %v465
    %1212 = vmatprep.subr.mxu0 %v474
    %1213 = vmatpush1.msra.mxu0 %v473
    %1214 = vmatprep.subr.mxu0 %v482
    %1215 = vmatpush1.msra.mxu0 %v481
    %1216 = vmatprep.subr.mxu0 %v490
    %1217 = vmatpush1.msra.mxu0 %v489
    %1218 = vmatprep.subr.mxu0 %v498
    %1219 = vmatpush1.msra.mxu0 %v497
    %1220 = vmatprep.subr.mxu0 %v506
    %1221 = vmatpush1.msra.mxu0 %v505
    %1222 = vmatprep.subr.mxu0 %v514
    %1223 = vmatpush1.msra.mxu0 %v513
    %1224 = vmatprep.subr.mxu0 %v522
    %1225 = vmatpush1.msra.mxu0 %v521
    %1226 = vmatprep.subr.mxu0 %v530
    %1227 = vmatpush1.msra.mxu0 %v529
    %1228 = vmatprep.subr.mxu0 %v538
    %1229 = vmatpush1.msra.mxu0 %v537
    %1230 = vmatprep.subr.mxu0 %v546
    %1231 = vmatpush1.msra.mxu0 %v545
    %1232 = vmatprep.subr.mxu0 %v554
    %1233 = vmatpush1.msra.mxu0 %v553
    %1234 = vmatprep.subr.mxu0 %v562
    %1235 = vmatpush1.msra.mxu0 %v561
    %1236 = vmatprep.subr.mxu0 %v570
    %1237 = vmatpush1.msra.mxu0 %v569
    %1238 = vmatprep.subr.mxu0 %v578
    %1239 = vmatpush1.msra.mxu0 %v577
    %1240 = vmatprep.subr.mxu0 %v586
    %1241 = vmatpush1.msra.mxu0 %v585
    %1242 = vmatprep.subr.mxu0 %v594
    %1243 = vmatpush1.msra.mxu0 %v593
    %1244 = vmatprep.subr.mxu0 %v602
    %1245 = vmatpush1.msra.mxu0 %v601
    %1246 = vmatprep.subr.mxu0 %v610
    %1247 = vmatpush1.msra.mxu0 %v609
    %1248 = vmatprep.subr.mxu0 %v618
    %1249 = vmatpush1.msra.mxu0 %v617
    %1250 = vmatprep.subr.mxu0 %v626
    %1251 = vmatpush1.msra.mxu0 %v625
    %1252 = vmatprep.mubr.f32.mxu0 %v686
    %1253 = vmatmul.mubr.f32.gmra.mrb[0].mxu0 %v684
    %v1254 = vpop.f32.mrb[0].mxu0
    %v1255 = vadd.f32 %v1184, %v1254
    %v1256 = vpop.f32.mrb[0].mxu0
    %v1257 = vadd.f32 %v1186, %v1256
    %1258 = vdwg.mxu0
    %v1259 = vmax.f32 %v829, 0.0
    %v1260 = vmax.f32 %v831, 0.0
    %v1261 = vmax.f32 %v971, 0.0
    %v1262 = vmax.f32 %v973, 0.0
    %v1263 = vmax.f32 %v1113, 0.0
    %v1264 = vmax.f32 %v1115, 0.0
    %v1265 = vmax.f32 %v1255, 0.0
    %v1266 = vmax.f32 %v1257, 0.0
    %v1267 = vld [vmem:[#allocation8] sm:$0xff]
    %v1268 = vld [vmem:[#allocation8 + $0x8] sm:$0xff]
    %v1269 = vld [vmem:[#allocation8 + $0x10] sm:$0xff]
    %v1270 = vld [vmem:[#allocation8 + $0x18] sm:$0xff]
    %v1271 = vld [vmem:[#allocation8 + $0x20] sm:$0xff]
    %v1272 = vld [vmem:[#allocation8 + $0x28] sm:$0xff]
    %v1273 = vld [vmem:[#allocation8 + $0x30] sm:$0xff]
    %v1274 = vld [vmem:[#allocation8 + $0x38] sm:$0xff]
    %v1275 = vld [vmem:[#allocation8 + $0x40] sm:$0xff]
    %v1276 = vld [vmem:[#allocation8 + $0x48] sm:$0xff]
    %v1277 = vld [vmem:[#allocation8 + $0x50] sm:$0xff]
    %v1278 = vld [vmem:[#allocation8 + $0x58] sm:$0xff]
    %v1279 = vld [vmem:[#allocation8 + $0x60] sm:$0xff]
    %v1280 = vld [vmem:[#allocation8 + $0x68] sm:$0xff]
    %v1281 = vld [vmem:[#allocation8 + $0x70] sm:$0xff]
    %v1282 = vld [vmem:[#allocation8 + $0x78] sm:$0xff]
    %v1283 = vld [vmem:[#allocation8 + $0x80] sm:$0xff]
    %v1284 = vld [vmem:[#allocation8 + $0x88] sm:$0xff]
    %v1285 = vld [vmem:[#allocation8 + $0x90] sm:$0xff]
    %v1286 = vld [vmem:[#allocation8 + $0x98] sm:$0xff]
    %v1287 = vld [vmem:[#allocation8 + $0xa0] sm:$0xff]
    %v1288 = vld [vmem:[#allocation8 + $0xa8] sm:$0xff]
    %v1289 = vld [vmem:[#allocation8 + $0xb0] sm:$0xff]
    %v1290 = vld [vmem:[#allocation8 + $0xb8] sm:$0xff]
    %v1291 = vld [vmem:[#allocation8 + $0xc0] sm:$0xff]
    %v1292 = vld [vmem:[#allocation8 + $0xc8] sm:$0xff]
    %v1293 = vld [vmem:[#allocation8 + $0xd0] sm:$0xff]
    %v1294 = vld [vmem:[#allocation8 + $0xd8] sm:$0xff]
    %v1295 = vld [vmem:[#allocation8 + $0xe0] sm:$0xff]
    %v1296 = vld [vmem:[#allocation8 + $0xe8] sm:$0xff]
    %v1297 = vld [vmem:[#allocation8 + $0xf0] sm:$0xff]
    %v1298 = vld [vmem:[#allocation8 + $0xf8] sm:$0xff]
    %v1299 = vld [vmem:[#allocation8 + $0x100] sm:$0xff]
    %v1300 = vld [vmem:[#allocation8 + $0x108] sm:$0xff]
    %v1301 = vld [vmem:[#allocation8 + $0x110] sm:$0xff]
    %v1302 = vld [vmem:[#allocation8 + $0x118] sm:$0xff]
    %v1303 = vld [vmem:[#allocation8 + $0x120] sm:$0xff]
    %v1304 = vld [vmem:[#allocation8 + $0x128] sm:$0xff]
    %v1305 = vld [vmem:[#allocation8 + $0x130] sm:$0xff]
    %v1306 = vld [vmem:[#allocation8 + $0x138] sm:$0xff]
    %v1307 = vld [vmem:[#allocation8 + $0x140] sm:$0xff]
    %v1308 = vld [vmem:[#allocation8 + $0x148] sm:$0xff]
    %v1309 = vld [vmem:[#allocation8 + $0x150] sm:$0xff]
    %v1310 = vld [vmem:[#allocation8 + $0x158] sm:$0xff]
    %v1311 = vld [vmem:[#allocation8 + $0x160] sm:$0xff]
    %v1312 = vld [vmem:[#allocation8 + $0x168] sm:$0xff]
    %v1313 = vld [vmem:[#allocation8 + $0x170] sm:$0xff]
    %v1314 = vld [vmem:[#allocation8 + $0x178] sm:$0xff]
    %v1315 = vld [vmem:[#allocation8 + $0x180] sm:$0xff]
    %v1316 = vld [vmem:[#allocation8 + $0x188] sm:$0xff]
    %v1317 = vld [vmem:[#allocation8 + $0x190] sm:$0xff]
    %v1318 = vld [vmem:[#allocation8 + $0x198] sm:$0xff]
    %v1319 = vld [vmem:[#allocation8 + $0x1a0] sm:$0xff]
    %v1320 = vld [vmem:[#allocation8 + $0x1a8] sm:$0xff]
    %v1321 = vld [vmem:[#allocation8 + $0x1b0] sm:$0xff]
    %v1322 = vld [vmem:[#allocation8 + $0x1b8] sm:$0xff]
    %v1323 = vld [vmem:[#allocation8 + $0x1c0] sm:$0xff]
    %v1324 = vld [vmem:[#allocation8 + $0x1c8] sm:$0xff]
    %v1325 = vld [vmem:[#allocation8 + $0x1d0] sm:$0xff]
    %v1326 = vld [vmem:[#allocation8 + $0x1d8] sm:$0xff]
    %v1327 = vld [vmem:[#allocation8 + $0x1e0] sm:$0xff]
    %v1328 = vld [vmem:[#allocation8 + $0x1e8] sm:$0xff]
    %v1329 = vld [vmem:[#allocation8 + $0x1f0] sm:$0xff]
    %v1330 = vld [vmem:[#allocation8 + $0x1f8] sm:$0xff]
    %v1331 = vld [vmem:[#allocation8 + $0x200] sm:$0xff]
    %v1332 = vld [vmem:[#allocation8 + $0x208] sm:$0xff]
    %v1333 = vld [vmem:[#allocation8 + $0x210] sm:$0xff]
    %v1334 = vld [vmem:[#allocation8 + $0x218] sm:$0xff]
    %v1335 = vld [vmem:[#allocation8 + $0x220] sm:$0xff]
    %v1336 = vld [vmem:[#allocation8 + $0x228] sm:$0xff]
    %v1337 = vld [vmem:[#allocation8 + $0x230] sm:$0xff]
    %v1338 = vld [vmem:[#allocation8 + $0x238] sm:$0xff]
    %v1339 = vld [vmem:[#allocation8 + $0x240] sm:$0xff]
    %v1340 = vld [vmem:[#allocation8 + $0x248] sm:$0xff]
    %v1341 = vld [vmem:[#allocation8 + $0x250] sm:$0xff]
    %v1342 = vld [vmem:[#allocation8 + $0x258] sm:$0xff]
    %v1343 = vld [vmem:[#allocation8 + $0x260] sm:$0xff]
    %v1344 = vld [vmem:[#allocation8 + $0x268] sm:$0xff]
    %v1345 = vld [vmem:[#allocation8 + $0x270] sm:$0xff]
    %v1346 = vld [vmem:[#allocation8 + $0x278] sm:$0xff]
    %v1347 = vld [vmem:[#allocation8 + $0x280] sm:$0xff]
    %v1348 = vld [vmem:[#allocation8 + $0x288] sm:$0xff]
    %v1349 = vld [vmem:[#allocation8 + $0x290] sm:$0xff]
    %v1350 = vld [vmem:[#allocation8 + $0x298] sm:$0xff]
    %v1351 = vld [vmem:[#allocation8 + $0x2a0] sm:$0xff]
    %v1352 = vld [vmem:[#allocation8 + $0x2a8] sm:$0xff]
    %v1353 = vld [vmem:[#allocation8 + $0x2b0] sm:$0xff]
    %v1354 = vld [vmem:[#allocation8 + $0x2b8] sm:$0xff]
    %v1355 = vld [vmem:[#allocation8 + $0x2c0] sm:$0xff]
    %v1356 = vld [vmem:[#allocation8 + $0x2c8] sm:$0xff]
    %v1357 = vld [vmem:[#allocation8 + $0x2d0] sm:$0xff]
    %v1358 = vld [vmem:[#allocation8 + $0x2d8] sm:$0xff]
    %v1359 = vld [vmem:[#allocation8 + $0x2e0] sm:$0xff]
    %v1360 = vld [vmem:[#allocation8 + $0x2e8] sm:$0xff]
    %v1361 = vld [vmem:[#allocation8 + $0x2f0] sm:$0xff]
    %v1362 = vld [vmem:[#allocation8 + $0x2f8] sm:$0xff]
    %v1363 = vld [vmem:[#allocation8 + $0x300] sm:$0xff]
    %v1364 = vld [vmem:[#allocation8 + $0x308] sm:$0xff]
    %v1365 = vld [vmem:[#allocation8 + $0x310] sm:$0xff]
    %v1366 = vld [vmem:[#allocation8 + $0x318] sm:$0xff]
    %v1367 = vld [vmem:[#allocation8 + $0x320] sm:$0xff]
    %v1368 = vld [vmem:[#allocation8 + $0x328] sm:$0xff]
    %v1369 = vld [vmem:[#allocation8 + $0x330] sm:$0xff]
    %v1370 = vld [vmem:[#allocation8 + $0x338] sm:$0xff]
    %v1371 = vld [vmem:[#allocation8 + $0x340] sm:$0xff]
    %v1372 = vld [vmem:[#allocation8 + $0x348] sm:$0xff]
    %v1373 = vld [vmem:[#allocation8 + $0x350] sm:$0xff]
    %v1374 = vld [vmem:[#allocation8 + $0x358] sm:$0xff]
    %v1375 = vld [vmem:[#allocation8 + $0x360] sm:$0xff]
    %v1376 = vld [vmem:[#allocation8 + $0x368] sm:$0xff]
    %v1377 = vld [vmem:[#allocation8 + $0x370] sm:$0xff]
    %v1378 = vld [vmem:[#allocation8 + $0x378] sm:$0xff]
    %v1379 = vld [vmem:[#allocation8 + $0x380] sm:$0xff]
    %v1380 = vld [vmem:[#allocation8 + $0x388] sm:$0xff]
    %v1381 = vld [vmem:[#allocation8 + $0x390] sm:$0xff]
    %v1382 = vld [vmem:[#allocation8 + $0x398] sm:$0xff]
    %v1383 = vld [vmem:[#allocation8 + $0x3a0] sm:$0xff]
    %v1384 = vld [vmem:[#allocation8 + $0x3a8] sm:$0xff]
    %v1385 = vld [vmem:[#allocation8 + $0x3b0] sm:$0xff]
    %v1386 = vld [vmem:[#allocation8 + $0x3b8] sm:$0xff]
    %v1387 = vld [vmem:[#allocation8 + $0x3c0] sm:$0xff]
    %v1388 = vld [vmem:[#allocation8 + $0x3c8] sm:$0xff]
    %v1389 = vld [vmem:[#allocation8 + $0x3d0] sm:$0xff]
    %v1390 = vld [vmem:[#allocation8 + $0x3d8] sm:$0xff]
    %v1391 = vld [vmem:[#allocation8 + $0x3e0] sm:$0xff]
    %v1392 = vld [vmem:[#allocation8 + $0x3e8] sm:$0xff]
    %v1393 = vld [vmem:[#allocation8 + $0x3f0] sm:$0xff]
    %v1394 = vld [vmem:[#allocation8 + $0x3f8] sm:$0xff]
    %v1395 = vld [vmem:[#allocation10] sm:$0x1]
    %v1397 = vlaneseq
    %v1398 = vshrl.u32 %v1397, 7
    %v1399 = vsub.s32 0, %v1398
    %v1400 = vrot.slane %v1395, %v1399
    %1402 = vmatprep.subr.mxu0 0.0
    %1403 = vmatpush1.msra.mxu0 %v1267
    %1404 = vmatprep.subr.mxu0 0.0
    %1405 = vmatpush1.msra.mxu0 %v1268
    %1406 = vmatprep.subr.mxu0 0.0
    %1407 = vmatpush1.msra.mxu0 %v1269
    %1408 = vmatprep.subr.mxu0 0.0
    %1409 = vmatpush1.msra.mxu0 %v1270
    %1410 = vmatprep.subr.mxu0 0.0
    %1411 = vmatpush1.msra.mxu0 %v1271
    %1412 = vmatprep.subr.mxu0 0.0
    %1413 = vmatpush1.msra.mxu0 %v1272
    %1414 = vmatprep.subr.mxu0 0.0
    %1415 = vmatpush1.msra.mxu0 %v1273
    %1416 = vmatprep.subr.mxu0 0.0
    %1417 = vmatpush1.msra.mxu0 %v1274
    %1418 = vmatprep.subr.mxu0 0.0
    %1419 = vmatpush1.msra.mxu0 %v1275
    %1420 = vmatprep.subr.mxu0 0.0
    %1421 = vmatpush1.msra.mxu0 %v1276
    %1422 = vmatprep.subr.mxu0 0.0
    %1423 = vmatpush1.msra.mxu0 %v1277
    %1424 = vmatprep.subr.mxu0 0.0
    %1425 = vmatpush1.msra.mxu0 %v1278
    %1426 = vmatprep.subr.mxu0 0.0
    %1427 = vmatpush1.msra.mxu0 %v1279
    %1428 = vmatprep.subr.mxu0 0.0
    %1429 = vmatpush1.msra.mxu0 %v1280
    %1430 = vmatprep.subr.mxu0 0.0
    %1431 = vmatpush1.msra.mxu0 %v1281
    %1432 = vmatprep.subr.mxu0 0.0
    %1433 = vmatpush1.msra.mxu0 %v1282
    %1434 = vmatprep.subr.mxu0 0.0
    %1435 = vmatpush1.msra.mxu0 %v1283
    %1436 = vmatprep.subr.mxu0 0.0
    %1437 = vmatpush1.msra.mxu0 %v1284
    %1438 = vmatprep.subr.mxu0 0.0
    %1439 = vmatpush1.msra.mxu0 %v1285
    %1440 = vmatprep.subr.mxu0 0.0
    %1441 = vmatpush1.msra.mxu0 %v1286
    %1442 = vmatprep.subr.mxu0 0.0
    %1443 = vmatpush1.msra.mxu0 %v1287
    %1444 = vmatprep.subr.mxu0 0.0
    %1445 = vmatpush1.msra.mxu0 %v1288
    %1446 = vmatprep.subr.mxu0 0.0
    %1447 = vmatpush1.msra.mxu0 %v1289
    %1448 = vmatprep.subr.mxu0 0.0
    %1449 = vmatpush1.msra.mxu0 %v1290
    %1450 = vmatprep.subr.mxu0 0.0
    %1451 = vmatpush1.msra.mxu0 %v1291
    %1452 = vmatprep.subr.mxu0 0.0
    %1453 = vmatpush1.msra.mxu0 %v1292
    %1454 = vmatprep.subr.mxu0 0.0
    %1455 = vmatpush1.msra.mxu0 %v1293
    %1456 = vmatprep.subr.mxu0 0.0
    %1457 = vmatpush1.msra.mxu0 %v1294
    %1458 = vmatprep.subr.mxu0 0.0
    %1459 = vmatpush1.msra.mxu0 %v1295
    %1460 = vmatprep.subr.mxu0 0.0
    %1461 = vmatpush1.msra.mxu0 %v1296
    %1462 = vmatprep.subr.mxu0 0.0
    %1463 = vmatpush1.msra.mxu0 %v1297
    %1464 = vmatprep.subr.mxu0 0.0
    %1465 = vmatpush1.msra.mxu0 %v1298
    %1466 = vmatprep.mubr.f32.mxu0 %v1260
    %1467 = vmatmul.mubr.f32.gmra.mrb[0].mxu0 %v1259
    %v1468 = vpop.f32.mrb[0].mxu0
    %v1469 = vadd.f32 %v1400, %v1468
    %v1470 = vpop.f32.mrb[0].mxu0
    %1471 = vdwg.mxu0
    %1472 = vmatprep.subr.mxu0 0.0
    %1473 = vmatpush1.msra.mxu0 %v1299
    %1474 = vmatprep.subr.mxu0 0.0
    %1475 = vmatpush1.msra.mxu0 %v1300
    %1476 = vmatprep.subr.mxu0 0.0
    %1477 = vmatpush1.msra.mxu0 %v1301
    %1478 = vmatprep.subr.mxu0 0.0
    %1479 = vmatpush1.msra.mxu0 %v1302
    %1480 = vmatprep.subr.mxu0 0.0
    %1481 = vmatpush1.msra.mxu0 %v1303
    %1482 = vmatprep.subr.mxu0 0.0
    %1483 = vmatpush1.msra.mxu0 %v1304
    %1484 = vmatprep.subr.mxu0 0.0
    %1485 = vmatpush1.msra.mxu0 %v1305
    %1486 = vmatprep.subr.mxu0 0.0
    %1487 = vmatpush1.msra.mxu0 %v1306
    %1488 = vmatprep.subr.mxu0 0.0
    %1489 = vmatpush1.msra.mxu0 %v1307
    %1490 = vmatprep.subr.mxu0 0.0
    %1491 = vmatpush1.msra.mxu0 %v1308
    %1492 = vmatprep.subr.mxu0 0.0
    %1493 = vmatpush1.msra.mxu0 %v1309
    %1494 = vmatprep.subr.mxu0 0.0
    %1495 = vmatpush1.msra.mxu0 %v1310
    %1496 = vmatprep.subr.mxu0 0.0
    %1497 = vmatpush1.msra.mxu0 %v1311
    %1498 = vmatprep.subr.mxu0 0.0
    %1499 = vmatpush1.msra.mxu0 %v1312
    %1500 = vmatprep.subr.mxu0 0.0
    %1501 = vmatpush1.msra.mxu0 %v1313
    %1502 = vmatprep.subr.mxu0 0.0
    %1503 = vmatpush1.msra.mxu0 %v1314
    %1504 = vmatprep.subr.mxu0 0.0
    %1505 = vmatpush1.msra.mxu0 %v1315
    %1506 = vmatprep.subr.mxu0 0.0
    %1507 = vmatpush1.msra.mxu0 %v1316
    %1508 = vmatprep.subr.mxu0 0.0
    %1509 = vmatpush1.msra.mxu0 %v1317
    %1510 = vmatprep.subr.mxu0 0.0
    %1511 = vmatpush1.msra.mxu0 %v1318
    %1512 = vmatprep.subr.mxu0 0.0
    %1513 = vmatpush1.msra.mxu0 %v1319
    %1514 = vmatprep.subr.mxu0 0.0
    %1515 = vmatpush1.msra.mxu0 %v1320
    %1516 = vmatprep.subr.mxu0 0.0
    %1517 = vmatpush1.msra.mxu0 %v1321
    %1518 = vmatprep.subr.mxu0 0.0
    %1519 = vmatpush1.msra.mxu0 %v1322
    %1520 = vmatprep.subr.mxu0 0.0
    %1521 = vmatpush1.msra.mxu0 %v1323
    %1522 = vmatprep.subr.mxu0 0.0
    %1523 = vmatpush1.msra.mxu0 %v1324
    %1524 = vmatprep.subr.mxu0 0.0
    %1525 = vmatpush1.msra.mxu0 %v1325
    %1526 = vmatprep.subr.mxu0 0.0
    %1527 = vmatpush1.msra.mxu0 %v1326
    %1528 = vmatprep.subr.mxu0 0.0
    %1529 = vmatpush1.msra.mxu0 %v1327
    %1530 = vmatprep.subr.mxu0 0.0
    %1531 = vmatpush1.msra.mxu0 %v1328
    %1532 = vmatprep.subr.mxu0 0.0
    %1533 = vmatpush1.msra.mxu0 %v1329
    %1534 = vmatprep.subr.mxu0 0.0
    %1535 = vmatpush1.msra.mxu0 %v1330
    %1536 = vmatprep.mubr.f32.mxu0 %v1262
    %1537 = vmatmul.mubr.f32.gmra.mrb[0].mxu0 %v1261
    %v1538 = vpop.f32.mrb[0].mxu0
    %v1539 = vadd.f32 %v1469, %v1538
    %v1540 = vpop.f32.mrb[0].mxu0
    %1541 = vdwg.mxu0
    %1542 = vmatprep.subr.mxu0 0.0
    %1543 = vmatpush1.msra.mxu0 %v1331
    %1544 = vmatprep.subr.mxu0 0.0
    %1545 = vmatpush1.msra.mxu0 %v1332
    %1546 = vmatprep.subr.mxu0 0.0
    %1547 = vmatpush1.msra.mxu0 %v1333
    %1548 = vmatprep.subr.mxu0 0.0
    %1549 = vmatpush1.msra.mxu0 %v1334
    %1550 = vmatprep.subr.mxu0 0.0
    %1551 = vmatpush1.msra.mxu0 %v1335
    %1552 = vmatprep.subr.mxu0 0.0
    %1553 = vmatpush1.msra.mxu0 %v1336
    %1554 = vmatprep.subr.mxu0 0.0
    %1555 = vmatpush1.msra.mxu0 %v1337
    %1556 = vmatprep.subr.mxu0 0.0
    %1557 = vmatpush1.msra.mxu0 %v1338
    %1558 = vmatprep.subr.mxu0 0.0
    %1559 = vmatpush1.msra.mxu0 %v1339
    %1560 = vmatprep.subr.mxu0 0.0
    %1561 = vmatpush1.msra.mxu0 %v1340
    %1562 = vmatprep.subr.mxu0 0.0
    %1563 = vmatpush1.msra.mxu0 %v1341
    %1564 = vmatprep.subr.mxu0 0.0
    %1565 = vmatpush1.msra.mxu0 %v1342
    %1566 = vmatprep.subr.mxu0 0.0
    %1567 = vmatpush1.msra.mxu0 %v1343
    %1568 = vmatprep.subr.mxu0 0.0
    %1569 = vmatpush1.msra.mxu0 %v1344
    %1570 = vmatprep.subr.mxu0 0.0
    %1571 = vmatpush1.msra.mxu0 %v1345
    %1572 = vmatprep.subr.mxu0 0.0
    %1573 = vmatpush1.msra.mxu0 %v1346
    %1574 = vmatprep.subr.mxu0 0.0
    %1575 = vmatpush1.msra.mxu0 %v1347
    %1576 = vmatprep.subr.mxu0 0.0
    %1577 = vmatpush1.msra.mxu0 %v1348
    %1578 = vmatprep.subr.mxu0 0.0
    %1579 = vmatpush1.msra.mxu0 %v1349
    %1580 = vmatprep.subr.mxu0 0.0
    %1581 = vmatpush1.msra.mxu0 %v1350
    %1582 = vmatprep.subr.mxu0 0.0
    %1583 = vmatpush1.msra.mxu0 %v1351
    %1584 = vmatprep.subr.mxu0 0.0
    %1585 = vmatpush1.msra.mxu0 %v1352
    %1586 = vmatprep.subr.mxu0 0.0
    %1587 = vmatpush1.msra.mxu0 %v1353
    %1588 = vmatprep.subr.mxu0 0.0
    %1589 = vmatpush1.msra.mxu0 %v1354
    %1590 = vmatprep.subr.mxu0 0.0
    %1591 = vmatpush1.msra.mxu0 %v1355
    %1592 = vmatprep.subr.mxu0 0.0
    %1593 = vmatpush1.msra.mxu0 %v1356
    %1594 = vmatprep.subr.mxu0 0.0
    %1595 = vmatpush1.msra.mxu0 %v1357
    %1596 = vmatprep.subr.mxu0 0.0
    %1597 = vmatpush1.msra.mxu0 %v1358
    %1598 = vmatprep.subr.mxu0 0.0
    %1599 = vmatpush1.msra.mxu0 %v1359
    %1600 = vmatprep.subr.mxu0 0.0
    %1601 = vmatpush1.msra.mxu0 %v1360
    %1602 = vmatprep.subr.mxu0 0.0
    %1603 = vmatpush1.msra.mxu0 %v1361
    %1604 = vmatprep.subr.mxu0 0.0
    %1605 = vmatpush1.msra.mxu0 %v1362
    %1606 = vmatprep.mubr.f32.mxu0 %v1264
    %1607 = vmatmul.mubr.f32.gmra.mrb[0].mxu0 %v1263
    %v1608 = vpop.f32.mrb[0].mxu0
    %v1609 = vadd.f32 %v1539, %v1608
    %v1610 = vpop.f32.mrb[0].mxu0
    %1611 = vdwg.mxu0
    %1612 = vmatprep.subr.mxu0 0.0
    %1613 = vmatpush1.msra.mxu0 %v1363
    %1614 = vmatprep.subr.mxu0 0.0
    %1615 = vmatpush1.msra.mxu0 %v1364
    %1616 = vmatprep.subr.mxu0 0.0
    %1617 = vmatpush1.msra.mxu0 %v1365
    %1618 = vmatprep.subr.mxu0 0.0
    %1619 = vmatpush1.msra.mxu0 %v1366
    %1620 = vmatprep.subr.mxu0 0.0
    %1621 = vmatpush1.msra.mxu0 %v1367
    %1622 = vmatprep.subr.mxu0 0.0
    %1623 = vmatpush1.msra.mxu0 %v1368
    %1624 = vmatprep.subr.mxu0 0.0
    %1625 = vmatpush1.msra.mxu0 %v1369
    %1626 = vmatprep.subr.mxu0 0.0
    %1627 = vmatpush1.msra.mxu0 %v1370
    %1628 = vmatprep.subr.mxu0 0.0
    %1629 = vmatpush1.msra.mxu0 %v1371
    %1630 = vmatprep.subr.mxu0 0.0
    %1631 = vmatpush1.msra.mxu0 %v1372
    %1632 = vmatprep.subr.mxu0 0.0
    %1633 = vmatpush1.msra.mxu0 %v1373
    %1634 = vmatprep.subr.mxu0 0.0
    %1635 = vmatpush1.msra.mxu0 %v1374
    %1636 = vmatprep.subr.mxu0 0.0
    %1637 = vmatpush1.msra.mxu0 %v1375
    %1638 = vmatprep.subr.mxu0 0.0
    %1639 = vmatpush1.msra.mxu0 %v1376
    %1640 = vmatprep.subr.mxu0 0.0
    %1641 = vmatpush1.msra.mxu0 %v1377
    %1642 = vmatprep.subr.mxu0 0.0
    %1643 = vmatpush1.msra.mxu0 %v1378
    %1644 = vmatprep.subr.mxu0 0.0
    %1645 = vmatpush1.msra.mxu0 %v1379
    %1646 = vmatprep.subr.mxu0 0.0
    %1647 = vmatpush1.msra.mxu0 %v1380
    %1648 = vmatprep.subr.mxu0 0.0
    %1649 = vmatpush1.msra.mxu0 %v1381
    %1650 = vmatprep.subr.mxu0 0.0
    %1651 = vmatpush1.msra.mxu0 %v1382
    %1652 = vmatprep.subr.mxu0 0.0
    %1653 = vmatpush1.msra.mxu0 %v1383
    %1654 = vmatprep.subr.mxu0 0.0
    %1655 = vmatpush1.msra.mxu0 %v1384
    %1656 = vmatprep.subr.mxu0 0.0
    %1657 = vmatpush1.msra.mxu0 %v1385
    %1658 = vmatprep.subr.mxu0 0.0
    %1659 = vmatpush1.msra.mxu0 %v1386
    %1660 = vmatprep.subr.mxu0 0.0
    %1661 = vmatpush1.msra.mxu0 %v1387
    %1662 = vmatprep.subr.mxu0 0.0
    %1663 = vmatpush1.msra.mxu0 %v1388
    %1664 = vmatprep.subr.mxu0 0.0
    %1665 = vmatpush1.msra.mxu0 %v1389
    %1666 = vmatprep.subr.mxu0 0.0
    %1667 = vmatpush1.msra.mxu0 %v1390
    %1668 = vmatprep.subr.mxu0 0.0
    %1669 = vmatpush1.msra.mxu0 %v1391
    %1670 = vmatprep.subr.mxu0 0.0
    %1671 = vmatpush1.msra.mxu0 %v1392
    %1672 = vmatprep.subr.mxu0 0.0
    %1673 = vmatpush1.msra.mxu0 %v1393
    %1674 = vmatprep.subr.mxu0 0.0
    %1675 = vmatpush1.msra.mxu0 %v1394
    %1676 = vmatprep.mubr.f32.mxu0 %v1266
    %1677 = vmatmul.mubr.f32.gmra.mrb[0].mxu0 %v1265
    %v1678 = vpop.f32.mrb[0].mxu0
    %v1679 = vadd.f32 %v1609, %v1678
    %v1680 = vpop.f32.mrb[0].mxu0
    %1681 = vdwg.mxu0
    %v1682 = vmax.f32 %v1679, 0.0
    %v1683 = vld [vmem:[#allocation11] sm:$0xff]
    %v1684 = vld [vmem:[#allocation11 + $0x8] sm:$0xff]
    %v1685 = vld [vmem:[#allocation11 + $0x10] sm:$0xff]
    %v1686 = vld [vmem:[#allocation11 + $0x18] sm:$0xff]
    %v1687 = vld [vmem:[#allocation11 + $0x20] sm:$0xff]
    %v1688 = vld [vmem:[#allocation11 + $0x28] sm:$0xff]
    %v1689 = vld [vmem:[#allocation11 + $0x30] sm:$0xff]
    %v1690 = vld [vmem:[#allocation11 + $0x38] sm:$0xff]
    %v1691 = vld [vmem:[#allocation11 + $0x40] sm:$0xff]
    %v1692 = vld [vmem:[#allocation11 + $0x48] sm:$0xff]
    %v1693 = vld [vmem:[#allocation11 + $0x50] sm:$0xff]
    %v1694 = vld [vmem:[#allocation11 + $0x58] sm:$0xff]
    %v1695 = vld [vmem:[#allocation11 + $0x60] sm:$0xff]
    %v1696 = vld [vmem:[#allocation11 + $0x68] sm:$0xff]
    %v1697 = vld [vmem:[#allocation11 + $0x70] sm:$0xff]
    %v1698 = vld [vmem:[#allocation11 + $0x78] sm:$0xff]
    %v1699 = vld [vmem:[#allocation13] sm:$0x1]
    %v1701 = vlaneseq
    %v1702 = vshrl.u32 %v1701, 7
    %v1703 = vsub.s32 0, %v1702
    %v1704 = vrot.slane %v1699, %v1703
    %1706 = vmatprep.subr.mxu0 0.0
    %1707 = vmatpush1.msra.mxu0 %v1683
    %1708 = vmatprep.subr.mxu0 0.0
    %1709 = vmatpush1.msra.mxu0 %v1684
    %1710 = vmatprep.subr.mxu0 0.0
    %1711 = vmatpush1.msra.mxu0 %v1685
    %1712 = vmatprep.subr.mxu0 0.0
    %1713 = vmatpush1.msra.mxu0 %v1686
    %1714 = vmatprep.subr.mxu0 0.0
    %1715 = vmatpush1.msra.mxu0 %v1687
    %1716 = vmatprep.subr.mxu0 0.0
    %1717 = vmatpush1.msra.mxu0 %v1688
    %1718 = vmatprep.subr.mxu0 0.0
    %1719 = vmatpush1.msra.mxu0 %v1689
    %1720 = vmatprep.subr.mxu0 0.0
    %1721 = vmatpush1.msra.mxu0 %v1690
    %1722 = vmatprep.subr.mxu0 0.0
    %1723 = vmatpush1.msra.mxu0 %v1691
    %1724 = vmatprep.subr.mxu0 0.0
    %1725 = vmatpush1.msra.mxu0 %v1692
    %1726 = vmatprep.subr.mxu0 0.0
    %1727 = vmatpush1.msra.mxu0 %v1693
    %1728 = vmatprep.subr.mxu0 0.0
    %1729 = vmatpush1.msra.mxu0 %v1694
    %1730 = vmatprep.subr.mxu0 0.0
    %1731 = vmatpush1.msra.mxu0 %v1695
    %1732 = vmatprep.subr.mxu0 0.0
    %1733 = vmatpush1.msra.mxu0 %v1696
    %1734 = vmatprep.subr.mxu0 0.0
    %1735 = vmatpush1.msra.mxu0 %v1697
    %1736 = vmatprep.subr.mxu0 0.0
    %1737 = vmatpush1.msra.mxu0 %v1698
    %1738 = vmatprep.subr.mxu0 0.0
    %1739 = vmatpush1.msra.mxu0 0.0
    %1740 = vmatprep.subr.mxu0 0.0
    %1741 = vmatpush1.msra.mxu0 0.0
    %1742 = vmatprep.subr.mxu0 0.0
    %1743 = vmatpush1.msra.mxu0 0.0
    %1744 = vmatprep.subr.mxu0 0.0
    %1745 = vmatpush1.msra.mxu0 0.0
    %1746 = vmatprep.subr.mxu0 0.0
    %1747 = vmatpush1.msra.mxu0 0.0
    %1748 = vmatprep.subr.mxu0 0.0
    %1749 = vmatpush1.msra.mxu0 0.0
    %1750 = vmatprep.subr.mxu0 0.0
    %1751 = vmatpush1.msra.mxu0 0.0
    %1752 = vmatprep.subr.mxu0 0.0
    %1753 = vmatpush1.msra.mxu0 0.0
    %1754 = vmatprep.subr.mxu0 0.0
    %1755 = vmatpush1.msra.mxu0 0.0
    %1756 = vmatprep.subr.mxu0 0.0
    %1757 = vmatpush1.msra.mxu0 0.0
    %1758 = vmatprep.subr.mxu0 0.0
    %1759 = vmatpush1.msra.mxu0 0.0
    %1760 = vmatprep.subr.mxu0 0.0
    %1761 = vmatpush1.msra.mxu0 0.0
    %1762 = vmatprep.subr.mxu0 0.0
    %1763 = vmatpush1.msra.mxu0 0.0
    %1764 = vmatprep.subr.mxu0 0.0
    %1765 = vmatpush1.msra.mxu0 0.0
    %1766 = vmatprep.subr.mxu0 0.0
    %1767 = vmatpush1.msra.mxu0 0.0
    %1768 = vmatprep.subr.mxu0 0.0
    %1769 = vmatpush1.msra.mxu0 0.0
    %1770 = vmatprep.mubr.f32.mxu0 0.0
    %1771 = vmatmul.mubr.f32.gmra.mrb[0].mxu0 %v1682
    %v1772 = vpop.f32.mrb[0].mxu0
    %v1773 = vadd.f32 %v1704, %v1772
    %v1774 = vpop.f32.mrb[0].mxu0
    %1775 = vdwg.mxu0
    %1776 = vst [vmem:[#allocation14] sm:$0x3] %v1773
    // Predicated region
    $region58: #{tpu_custom_call.1} parent=1 // pred_check
      _
    $region59: #{tpu_custom_call.1} parent=1 // pred_check_branch
      %1778 = sbr.rel (0) target = $region61
    $region60: #{tpu_custom_call.1} parent=1 // pred_region
      %s1780 = ssub.s32 32, 32
      %1781 = vsyncadd [#allocation4], %s1780
      %s1783 = sshll.u32 [#allocation14], 4
      %s1784 = int_to_ptr.vmem [resolvable:$true] %s1783
      %1786 = dma.vmem_to_hbm [thread:$0]  %s1784, 32, %s7, [#allocation4]
    $region61: #{tpu_custom_call.1} parent=1 // pred_fallthru
      _
    // Predicated region
    $region62: #{tpu_custom_call.1} parent=1 // pred_check
      _
    $region63: #{tpu_custom_call.1} parent=1 // pred_check_branch
      %1788 = sbr.rel (0) target = $region65
    $region64: #{tpu_custom_call.1} parent=1 // pred_region
      %1789 = dma.done [#allocation4], 32
    $region65: #{tpu_custom_call.1} parent=1 // pred_fallthru
      _
    %1790 = vsyncpa [#allocation3], 1
    %1791 = vsyncpa [#allocation6], 1
    %1792 = vsyncpa [#allocation9], 1
    %1793 = vsyncpa [#allocation12], 1
    %1794 = vsyncpa [#allocation4], 1

</llo_original>
